<compile_context>
chip_gen: v7x
topology: tpu7x:2x2x1
jax: 0.10.0
libtpu: 0.0.40
codegen_flags: <defaults>
</compile_context>

<pallas_src>
import functools

import jax
import jax.numpy as jnp
from jax import lax
from jax.experimental import pallas as pl
from jax.experimental.pallas import tpu as pltpu


def ner_kernel(x2_ref,      # (T*B, 2E)   [emb(t) | emb(T-1-t)] time-major, flat
               w_in_ref,    # (2E, 8Hp)   fused input->gate weight (interleaved cols)
               whh_ref,     # (2Hp, 8Hp)  fused block-diagonal hidden->gate weight
               b_ref,       # (1, 8Hp)    fused bias (b_ih + b_hh, both directions)
               wfc_ref,     # (2Hp, tagP) fc weight (zero-padded to lane grain)
               bfc_ref,     # (1, tagP)   fc bias
               out_ref,     # (T*B, tagP) tag scores, time-major, flat
               gin_ref,     # scratch (T*B, 8Hp) precomputed input gates
               hs_ref,      # scratch (T*B, 2Hp) [h_fwd | h_bwd] per (t, b)
               *, T, B, Hp):
    H2 = 2 * Hp

    # (1) Hoisted input->gate projection for both directions; bias added once.
    gin_ref[...] = (
        jnp.dot(x2_ref[...], w_in_ref[...], preferred_element_type=jnp.float32)
        + b_ref[...])

    whh = whh_ref[...]                         # load fused recurrent weight once

    h = jnp.zeros((B, H2), jnp.float32)        # [h_fwd | h_bwd]
    c = jnp.zeros((B, H2), jnp.float32)        # [c_fwd | c_bwd]

    # (2) Fully unrolled serial recurrence; ONE fused MXU matmul per timestep.
    #     All gate slices are 2Hp (multiple of 128) wide at 128-aligned offsets.
    for t in range(T):
        tb = T - 1 - t
        gates = gin_ref[t * B:(t + 1) * B, :] + jnp.dot(
            h, whh, preferred_element_type=jnp.float32)          # (B, 8Hp)
        i = jax.nn.sigmoid(gates[:, 0 * H2:1 * H2])
        f = jax.nn.sigmoid(gates[:, 1 * H2:2 * H2])
        g = jnp.tanh(gates[:, 2 * H2:3 * H2])
        o = jax.nn.sigmoid(gates[:, 3 * H2:4 * H2])
        c = f * c + i * g
        h = o * jnp.tanh(c)
        # fwd hidden belongs to original time t, bwd hidden to time T-1-t.
        hs_ref[t * B:(t + 1) * B, 0:Hp] = h[:, 0:Hp]
        hs_ref[tb * B:(tb + 1) * B, Hp:H2] = h[:, Hp:H2]

    # (3) Single contiguous FC over the flat (T*B, 2Hp) hidden-state slab.
    out_ref[...] = (
        jnp.dot(hs_ref[...], wfc_ref[...], preferred_element_type=jnp.float32)
        + bfc_ref[...])


def _round_up(x, m):
    return (x + m - 1) // m * m


def _build_fused_params(params, E, H, Hp, tag_p):
    """Build interleaved-gate fused weights, zero-padded to hidden size Hp.

    Fused gate column index (g, d, k) -> g * 2Hp + d * Hp + k with
    g in {i, f, g, o}, d in {fwd, bwd}, k in [0, Hp).
    Zero-padded columns give gate pre-activation 0 -> i=f=o=0.5, g=0, so the
    padded hidden/cell units stay exactly 0 and never affect real outputs.
    """
    f32 = jnp.float32
    wih_f = params["wih_f"].astype(f32)      # (E, 4H), cols in PyTorch [i f g o]
    wih_b = params["wih_b"].astype(f32)
    whh_f = params["whh_f"].astype(f32)      # (H, 4H)
    whh_b = params["whh_b"].astype(f32)
    b_f = params["b_f"].astype(f32)          # (1, 4H) = b_ih + b_hh
    b_b = params["b_b"].astype(f32)
    wfc = params["wfc"].astype(f32)          # (2H, tag)
    bfc = params["bfc"].astype(f32)          # (1, tag)
    tag = wfc.shape[1]

    w_in = jnp.zeros((2 * E, 4, 2, Hp), f32)
    w_in = w_in.at[:E, :, 0, :H].set(wih_f.reshape(E, 4, H))
    w_in = w_in.at[E:, :, 1, :H].set(wih_b.reshape(E, 4, H))
    w_in = w_in.reshape(2 * E, 8 * Hp)

    whh = jnp.zeros((2 * Hp, 4, 2, Hp), f32)
    whh = whh.at[:H, :, 0, :H].set(whh_f.reshape(H, 4, H))
    whh = whh.at[Hp:Hp + H, :, 1, :H].set(whh_b.reshape(H, 4, H))
    whh = whh.reshape(2 * Hp, 8 * Hp)

    b = jnp.zeros((1, 4, 2, Hp), f32)
    b = b.at[:, :, 0, :H].set(b_f.reshape(1, 4, H))
    b = b.at[:, :, 1, :H].set(b_b.reshape(1, 4, H))
    b = b.reshape(1, 8 * Hp)

    wfc_p = jnp.zeros((2 * Hp, tag_p), f32)
    wfc_p = wfc_p.at[:H, :tag].set(wfc[:H])
    wfc_p = wfc_p.at[Hp:Hp + H, :tag].set(wfc[H:])
    bfc_p = jnp.zeros((1, tag_p), f32).at[:, :tag].set(bfc)
    return w_in, whh, b, wfc_p, bfc_p


def ner_forward_pallas(tokens, params):
    """tokens: (B, T) int32.  Returns tag_scores (B, T, tagset) float32."""
    emb_table = params["embedding"]          # (V, E), row 0 is zero (padding_idx)
    B, T = tokens.shape
    E = emb_table.shape[1]
    H = params["whh_f"].shape[0]
    tagset = params["wfc"].shape[1]

    B_p = _round_up(max(B, 8), 8)              # sublane grain
    Hp = _round_up(max(H, 64), 64)             # per-direction hidden: 2*Hp % 128 == 0
    tag_p = _round_up(max(tagset, 128), 128)   # lane grain (lane-dense output slab)

    # Pad batch with padding_idx=0 rows (embedding row 0 is zero); sliced off later.
    tokens_p = jnp.pad(tokens, ((0, B_p - B), (0, 0)))

    # Embedding gather directly in time-major order (XLA gather); concatenate
    # the time-reversed copy on the feature axis for the backward direction so
    # the in-kernel serial loop never reverses anything.
    emb_tm = jnp.take(emb_table, tokens_p.T, axis=0)          # (T, B_p, E)
    x2 = jnp.concatenate([emb_tm, emb_tm[::-1]], axis=-1)     # (T, B_p, 2E)
    x2 = x2.reshape(T * B_p, 2 * E).astype(jnp.float32)

    w_in, whh, b, wfc_p, bfc_p = _build_fused_params(params, E, H, Hp, tag_p)

    # VMEM footprint / cost hints.
    nbytes = 4 * (x2.size + w_in.size + whh.size + b.size + wfc_p.size
                  + bfc_p.size + T * B_p * tag_p
                  + T * B_p * 8 * Hp + T * B_p * 2 * Hp)
    flops = 2 * T * B_p * (2 * E * 8 * Hp + 2 * Hp * 8 * Hp + 2 * Hp * tag_p)
    transcendentals = T * B_p * (8 * Hp + 2 * Hp)

    vmem = pl.BlockSpec(memory_space=pltpu.MemorySpace.VMEM)
    out = pl.pallas_call(
        functools.partial(ner_kernel, T=T, B=B_p, Hp=Hp),
        out_shape=jax.ShapeDtypeStruct((T * B_p, tag_p), jnp.float32),
        in_specs=[vmem] * 6,
        out_specs=vmem,
        scratch_shapes=[
            pltpu.VMEM((T * B_p, 8 * Hp), jnp.float32),   # precomputed input gates
            pltpu.VMEM((T * B_p, 2 * Hp), jnp.float32),   # [h_fwd | h_bwd] states
        ],
        compiler_params=pltpu.CompilerParams(
            vmem_limit_bytes=int(2 * nbytes + (8 << 20))),
        cost_estimate=pl.CostEstimate(
            flops=flops, transcendentals=transcendentals, bytes_accessed=nbytes),
    )(x2, w_in, whh, b, wfc_p, bfc_p)

    out = out.reshape(T, B_p, tag_p)
    return jnp.transpose(out, (1, 0, 2))[:B, :, :tagset]     # (B, T, tagset)


def ner_forward_reference(tokens, params):
    """Pure-JAX reference mirroring PyTorch nn.LSTM(bidirectional) semantics."""
    emb_table = params["embedding"]
    H = params["whh_f"].shape[0]
    embedded = jnp.take(emb_table, tokens, axis=0)            # (B, T, E)

    def run_dir(x_seq, wih, whh, b):
        B = x_seq.shape[0]

        def cell(carry, x_t):
            h, c = carry
            gates = x_t @ wih + h @ whh + b
            i = jax.nn.sigmoid(gates[:, 0:H])
            f = jax.nn.sigmoid(gates[:, H:2 * H])
            g = jnp.tanh(gates[:, 2 * H:3 * H])
            o = jax.nn.sigmoid(gates[:, 3 * H:4 * H])
            c = f * c + i * g
            h = o * jnp.tanh(c)
            return (h, c), h

        init = (jnp.zeros((B, H), jnp.float32), jnp.zeros((B, H), jnp.float32))
        _, hs = lax.scan(cell, init, jnp.transpose(x_seq, (1, 0, 2)))
        return jnp.transpose(hs, (1, 0, 2))                   # (B, T, H)

    h_f = run_dir(embedded, params["wih_f"], params["whh_f"], params["b_f"])
    h_b = run_dir(embedded[:, ::-1, :], params["wih_b"], params["whh_b"],
                  params["b_b"])[:, ::-1, :]
    h_cat = jnp.concatenate([h_f, h_b], axis=-1)              # (B, T, 2H)
    return h_cat @ params["wfc"] + params["bfc"]


def init_params(key, vocab_size, embed_dim, hidden_dim, tagset_size):
    ks = jax.random.split(key, 12)
    H, E = hidden_dim, embed_dim
    s = 1.0 / jnp.sqrt(jnp.float32(H))

    def u(k, shape):
        return jax.random.uniform(k, shape, jnp.float32, -s, s)

    emb = jax.random.normal(ks[0], (vocab_size, E), jnp.float32)
    emb = emb.at[0].set(0.0)                                  # padding_idx=0

    # LSTM weights stored pre-transposed for x @ W layout; gate order i,f,g,o.
    params = {
        "embedding": emb,
        "wih_f": u(ks[1], (E, 4 * H)),
        "whh_f": u(ks[2], (H, 4 * H)),
        "b_f":   u(ks[3], (1, 4 * H)) + u(ks[4], (1, 4 * H)),   # b_ih + b_hh
        "wih_b": u(ks[5], (E, 4 * H)),
        "whh_b": u(ks[6], (H, 4 * H)),
        "b_b":   u(ks[7], (1, 4 * H)) + u(ks[10], (1, 4 * H)),  # independent keys
        "wfc":   u(ks[8], (2 * H, tagset_size)),
        "bfc":   u(ks[9], (1, tagset_size)),
    }
    return params


if __name__ == "__main__":
    vocab_size, embed_dim, hidden_dim, tagset_size = 50, 32, 32, 8
    B, T = 2, 8

    key = jax.random.PRNGKey(0)
    k_param, k_tok = jax.random.split(key)
    params = init_params(k_param, vocab_size, embed_dim, hidden_dim, tagset_size)
    tokens = jax.random.randint(k_tok, (B, T), 0, vocab_size, dtype=jnp.int32)

    out = ner_forward_pallas(tokens, params)
    out = jax.block_until_ready(out)
    assert out.shape == (B, T, tagset_size), out.shape

    ref = jax.block_until_ready(ner_forward_reference(tokens, params))
    assert jnp.allclose(out, ref, rtol=1e-3, atol=1e-3), (
        float(jnp.max(jnp.abs(out - ref))))

    print("KERNEL_OK")
</pallas_src>

<mosaic_0001>
module attributes {stable_mosaic.version = 11 : i64} {
  func.func @ner_kernel(%arg0: memref<64x64xf32, #tpu.memory_space<vmem>>, %arg1: memref<64x512xf32, #tpu.memory_space<vmem>>, %arg2: memref<128x512xf32, #tpu.memory_space<vmem>>, %arg3: memref<1x512xf32, #tpu.memory_space<vmem>>, %arg4: memref<128x128xf32, #tpu.memory_space<vmem>>, %arg5: memref<1x128xf32, #tpu.memory_space<vmem>>, %arg6: memref<64x128xf32, #tpu.memory_space<vmem>>, %arg7: memref<64x512xf32, #tpu.memory_space<vmem>>, %arg8: memref<64x128xf32, #tpu.memory_space<vmem>>) attributes {dimension_semantics = [], scalar_prefetch = 0 : i64, scratch_operands = 2 : i64, tpu.core_type = #tpu.core_type<tc>} {
    %c0 = arith.constant 0 : index
    %c0_0 = arith.constant 0 : index
    %0 = vector.load %arg0[%c0, %c0_0] : memref<64x64xf32, #tpu.memory_space<vmem>>, vector<64x64xf32>
    %c0_1 = arith.constant 0 : index
    %c0_2 = arith.constant 0 : index
    %1 = vector.load %arg1[%c0_1, %c0_2] : memref<64x512xf32, #tpu.memory_space<vmem>>, vector<64x512xf32>
    %cst = arith.constant dense<0.000000e+00> : vector<64x512xf32>
    %2 = tpu.matmul %0, %1, %cst {dimension_numbers = #tpu.dot_dimension_numbers<[1], [0], [0], [1], [0, 0, 1, 1], [], []>} : vector<64x64xf32>, vector<64x512xf32>, vector<64x512xf32> -> vector<64x512xf32>
    %c0_3 = arith.constant 0 : index
    %c0_4 = arith.constant 0 : index
    %3 = vector.load %arg3[%c0_3, %c0_4] : memref<1x512xf32, #tpu.memory_space<vmem>>, vector<1x512xf32>
    %4 = vector.broadcast %3 : vector<1x512xf32> to vector<64x512xf32>
    %5 = arith.addf %2, %4 : vector<64x512xf32>
    %c0_5 = arith.constant 0 : index
    %c0_6 = arith.constant 0 : index
    %6 = vector.load %arg7[%c0_5, %c0_6] : memref<64x512xf32, #tpu.memory_space<vmem>>, vector<64x512xf32>
    tpu.vector_store %arg7[%c0_5, %c0_6], %5 {strides = array<i32>} : memref<64x512xf32, #tpu.memory_space<vmem>>, vector<64x512xf32>,
    %c0_7 = arith.constant 0 : index
    %c0_8 = arith.constant 0 : index
    %7 = vector.load %arg2[%c0_7, %c0_8] : memref<128x512xf32, #tpu.memory_space<vmem>>, vector<128x512xf32>
    %cst_9 = arith.constant 0.000000e+00 : f32
    %8 = vector.broadcast %cst_9 : f32 to vector<8x128xf32>
    %cst_10 = arith.constant 0.000000e+00 : f32
    %9 = vector.broadcast %cst_10 : f32 to vector<8x128xf32>
    %c0_11 = arith.constant 0 : index
    %c0_12 = arith.constant 0 : index
    %10 = vector.load %arg7[%c0_11, %c0_12] : memref<64x512xf32, #tpu.memory_space<vmem>>, vector<8x512xf32>
    %cst_13 = arith.constant dense<0.000000e+00> : vector<8x512xf32>
    %11 = tpu.matmul %8, %7, %cst_13 {dimension_numbers = #tpu.dot_dimension_numbers<[1], [0], [0], [1], [0, 0, 1, 1], [], []>} : vector<8x128xf32>, vector<128x512xf32>, vector<8x512xf32> -> vector<8x512xf32>
    %12 = arith.addf %10, %11 : vector<8x512xf32>
    %13 = vector.extract_strided_slice %12 {offsets = [0, 0], sizes = [8, 128], strides = [1, 1]} : vector<8x512xf32> to vector<8x128xf32>
    %14 = arith.negf %13 : vector<8x128xf32>
    %15 = math.exp %14 : vector<8x128xf32>
    %cst_14 = arith.constant 1.000000e+00 : f32
    %16 = vector.broadcast %cst_14 : f32 to vector<8x128xf32>
    %17 = arith.addf %16, %15 : vector<8x128xf32>
    %18 = arith.divf %16, %17 : vector<8x128xf32>
    %19 = vector.extract_strided_slice %12 {offsets = [0, 128], sizes = [8, 128], strides = [1, 1]} : vector<8x512xf32> to vector<8x128xf32>
    %20 = arith.negf %19 : vector<8x128xf32>
    %21 = math.exp %20 : vector<8x128xf32>
    %cst_15 = arith.constant 1.000000e+00 : f32
    %22 = vector.broadcast %cst_15 : f32 to vector<8x128xf32>
    %23 = arith.addf %22, %21 : vector<8x128xf32>
    %24 = arith.divf %22, %23 : vector<8x128xf32>
    %25 = vector.extract_strided_slice %12 {offsets = [0, 256], sizes = [8, 128], strides = [1, 1]} : vector<8x512xf32> to vector<8x128xf32>
    %26 = math.tanh %25 : vector<8x128xf32>
    %27 = vector.extract_strided_slice %12 {offsets = [0, 384], sizes = [8, 128], strides = [1, 1]} : vector<8x512xf32> to vector<8x128xf32>
    %28 = arith.negf %27 : vector<8x128xf32>
    %29 = math.exp %28 : vector<8x128xf32>
    %cst_16 = arith.constant 1.000000e+00 : f32
    %30 = vector.broadcast %cst_16 : f32 to vector<8x128xf32>
    %31 = arith.addf %30, %29 : vector<8x128xf32>
    %32 = arith.divf %30, %31 : vector<8x128xf32>
    %33 = arith.mulf %24, %9 : vector<8x128xf32>
    %34 = arith.mulf %18, %26 : vector<8x128xf32>
    %35 = arith.addf %33, %34 : vector<8x128xf32>
    %36 = math.tanh %35 : vector<8x128xf32>
    %37 = arith.mulf %32, %36 : vector<8x128xf32>
    %38 = vector.extract_strided_slice %37 {offsets = [0, 0], sizes = [8, 64], strides = [1, 1]} : vector<8x128xf32> to vector<8x64xf32>
    %c0_17 = arith.constant 0 : index
    %c0_18 = arith.constant 0 : index
    %39 = vector.load %arg8[%c0_17, %c0_18] : memref<64x128xf32, #tpu.memory_space<vmem>>, vector<8x64xf32>
    tpu.vector_store %arg8[%c0_17, %c0_18], %38 {strides = array<i32>} : memref<64x128xf32, #tpu.memory_space<vmem>>, vector<8x64xf32>,
    %40 = vector.extract_strided_slice %37 {offsets = [0, 64], sizes = [8, 64], strides = [1, 1]} : vector<8x128xf32> to vector<8x64xf32>
    %c56 = arith.constant 56 : index
    %c64 = arith.constant 64 : index
    %41 = vector.load %arg8[%c56, %c64] : memref<64x128xf32, #tpu.memory_space<vmem>>, vector<8x64xf32>
    tpu.vector_store %arg8[%c56, %c64], %40 {strides = array<i32>} : memref<64x128xf32, #tpu.memory_space<vmem>>, vector<8x64xf32>,
    %c8 = arith.constant 8 : index
    %c0_19 = arith.constant 0 : index
    %42 = vector.load %arg7[%c8, %c0_19] : memref<64x512xf32, #tpu.memory_space<vmem>>, vector<8x512xf32>
    %cst_20 = arith.constant dense<0.000000e+00> : vector<8x512xf32>
    %43 = tpu.matmul %37, %7, %cst_20 {dimension_numbers = #tpu.dot_dimension_numbers<[1], [0], [0], [1], [0, 0, 1, 1], [], []>} : vector<8x128xf32>, vector<128x512xf32>, vector<8x512xf32> -> vector<8x512xf32>
    %44 = arith.addf %42, %43 : vector<8x512xf32>
    %45 = vector.extract_strided_slice %44 {offsets = [0, 0], sizes = [8, 128], strides = [1, 1]} : vector<8x512xf32> to vector<8x128xf32>
    %46 = arith.negf %45 : vector<8x128xf32>
    %47 = math.exp %46 : vector<8x128xf32>
    %cst_21 = arith.constant 1.000000e+00 : f32
    %48 = vector.broadcast %cst_21 : f32 to vector<8x128xf32>
    %49 = arith.addf %48, %47 : vector<8x128xf32>
    %50 = arith.divf %48, %49 : vector<8x128xf32>
    %51 = vector.extract_strided_slice %44 {offsets = [0, 128], sizes = [8, 128], strides = [1, 1]} : vector<8x512xf32> to vector<8x128xf32>
    %52 = arith.negf %51 : vector<8x128xf32>
    %53 = math.exp %52 : vector<8x128xf32>
    %cst_22 = arith.constant 1.000000e+00 : f32
    %54 = vector.broadcast %cst_22 : f32 to vector<8x128xf32>
    %55 = arith.addf %54, %53 : vector<8x128xf32>
    %56 = arith.divf %54, %55 : vector<8x128xf32>
    %57 = vector.extract_strided_slice %44 {offsets = [0, 256], sizes = [8, 128], strides = [1, 1]} : vector<8x512xf32> to vector<8x128xf32>
    %58 = math.tanh %57 : vector<8x128xf32>
    %59 = vector.extract_strided_slice %44 {offsets = [0, 384], sizes = [8, 128], strides = [1, 1]} : vector<8x512xf32> to vector<8x128xf32>
    %60 = arith.negf %59 : vector<8x128xf32>
    %61 = math.exp %60 : vector<8x128xf32>
    %cst_23 = arith.constant 1.000000e+00 : f32
    %62 = vector.broadcast %cst_23 : f32 to vector<8x128xf32>
    %63 = arith.addf %62, %61 : vector<8x128xf32>
    %64 = arith.divf %62, %63 : vector<8x128xf32>
    %65 = arith.mulf %56, %35 : vector<8x128xf32>
    %66 = arith.mulf %50, %58 : vector<8x128xf32>
    %67 = arith.addf %65, %66 : vector<8x128xf32>
    %68 = math.tanh %67 : vector<8x128xf32>
    %69 = arith.mulf %64, %68 : vector<8x128xf32>
    %70 = vector.extract_strided_slice %69 {offsets = [0, 0], sizes = [8, 64], strides = [1, 1]} : vector<8x128xf32> to vector<8x64xf32>
    %c8_24 = arith.constant 8 : index
    %c0_25 = arith.constant 0 : index
    %71 = vector.load %arg8[%c8_24, %c0_25] : memref<64x128xf32, #tpu.memory_space<vmem>>, vector<8x64xf32>
    tpu.vector_store %arg8[%c8_24, %c0_25], %70 {strides = array<i32>} : memref<64x128xf32, #tpu.memory_space<vmem>>, vector<8x64xf32>,
    %72 = vector.extract_strided_slice %69 {offsets = [0, 64], sizes = [8, 64], strides = [1, 1]} : vector<8x128xf32> to vector<8x64xf32>
    %c48 = arith.constant 48 : index
    %c64_26 = arith.constant 64 : index
    %73 = vector.load %arg8[%c48, %c64_26] : memref<64x128xf32, #tpu.memory_space<vmem>>, vector<8x64xf32>
    tpu.vector_store %arg8[%c48, %c64_26], %72 {strides = array<i32>} : memref<64x128xf32, #tpu.memory_space<vmem>>, vector<8x64xf32>,
    %c16 = arith.constant 16 : index
    %c0_27 = arith.constant 0 : index
    %74 = vector.load %arg7[%c16, %c0_27] : memref<64x512xf32, #tpu.memory_space<vmem>>, vector<8x512xf32>
    %cst_28 = arith.constant dense<0.000000e+00> : vector<8x512xf32>
    %75 = tpu.matmul %69, %7, %cst_28 {dimension_numbers = #tpu.dot_dimension_numbers<[1], [0], [0], [1], [0, 0, 1, 1], [], []>} : vector<8x128xf32>, vector<128x512xf32>, vector<8x512xf32> -> vector<8x512xf32>
    %76 = arith.addf %74, %75 : vector<8x512xf32>
    %77 = vector.extract_strided_slice %76 {offsets = [0, 0], sizes = [8, 128], strides = [1, 1]} : vector<8x512xf32> to vector<8x128xf32>
    %78 = arith.negf %77 : vector<8x128xf32>
    %79 = math.exp %78 : vector<8x128xf32>
    %cst_29 = arith.constant 1.000000e+00 : f32
    %80 = vector.broadcast %cst_29 : f32 to vector<8x128xf32>
    %81 = arith.addf %80, %79 : vector<8x128xf32>
    %82 = arith.divf %80, %81 : vector<8x128xf32>
    %83 = vector.extract_strided_slice %76 {offsets = [0, 128], sizes = [8, 128], strides = [1, 1]} : vector<8x512xf32> to vector<8x128xf32>
    %84 = arith.negf %83 : vector<8x128xf32>
    %85 = math.exp %84 : vector<8x128xf32>
    %cst_30 = arith.constant 1.000000e+00 : f32
    %86 = vector.broadcast %cst_30 : f32 to vector<8x128xf32>
    %87 = arith.addf %86, %85 : vector<8x128xf32>
    %88 = arith.divf %86, %87 : vector<8x128xf32>
    %89 = vector.extract_strided_slice %76 {offsets = [0, 256], sizes = [8, 128], strides = [1, 1]} : vector<8x512xf32> to vector<8x128xf32>
    %90 = math.tanh %89 : vector<8x128xf32>
    %91 = vector.extract_strided_slice %76 {offsets = [0, 384], sizes = [8, 128], strides = [1, 1]} : vector<8x512xf32> to vector<8x128xf32>
    %92 = arith.negf %91 : vector<8x128xf32>
    %93 = math.exp %92 : vector<8x128xf32>
    %cst_31 = arith.constant 1.000000e+00 : f32
    %94 = vector.broadcast %cst_31 : f32 to vector<8x128xf32>
    %95 = arith.addf %94, %93 : vector<8x128xf32>
    %96 = arith.divf %94, %95 : vector<8x128xf32>
    %97 = arith.mulf %88, %67 : vector<8x128xf32>
    %98 = arith.mulf %82, %90 : vector<8x128xf32>
    %99 = arith.addf %97, %98 : vector<8x128xf32>
    %100 = math.tanh %99 : vector<8x128xf32>
    %101 = arith.mulf %96, %100 : vector<8x128xf32>
    %102 = vector.extract_strided_slice %101 {offsets = [0, 0], sizes = [8, 64], strides = [1, 1]} : vector<8x128xf32> to vector<8x64xf32>
    %c16_32 = arith.constant 16 : index
    %c0_33 = arith.constant 0 : index
    %103 = vector.load %arg8[%c16_32, %c0_33] : memref<64x128xf32, #tpu.memory_space<vmem>>, vector<8x64xf32>
    tpu.vector_store %arg8[%c16_32, %c0_33], %102 {strides = array<i32>} : memref<64x128xf32, #tpu.memory_space<vmem>>, vector<8x64xf32>,
    %104 = vector.extract_strided_slice %101 {offsets = [0, 64], sizes = [8, 64], strides = [1, 1]} : vector<8x128xf32> to vector<8x64xf32>
    %c40 = arith.constant 40 : index
    %c64_34 = arith.constant 64 : index
    %105 = vector.load %arg8[%c40, %c64_34] : memref<64x128xf32, #tpu.memory_space<vmem>>, vector<8x64xf32>
    tpu.vector_store %arg8[%c40, %c64_34], %104 {strides = array<i32>} : memref<64x128xf32, #tpu.memory_space<vmem>>, vector<8x64xf32>,
    %c24 = arith.constant 24 : index
    %c0_35 = arith.constant 0 : index
    %106 = vector.load %arg7[%c24, %c0_35] : memref<64x512xf32, #tpu.memory_space<vmem>>, vector<8x512xf32>
    %cst_36 = arith.constant dense<0.000000e+00> : vector<8x512xf32>
    %107 = tpu.matmul %101, %7, %cst_36 {dimension_numbers = #tpu.dot_dimension_numbers<[1], [0], [0], [1], [0, 0, 1, 1], [], []>} : vector<8x128xf32>, vector<128x512xf32>, vector<8x512xf32> -> vector<8x512xf32>
    %108 = arith.addf %106, %107 : vector<8x512xf32>
    %109 = vector.extract_strided_slice %108 {offsets = [0, 0], sizes = [8, 128], strides = [1, 1]} : vector<8x512xf32> to vector<8x128xf32>
    %110 = arith.negf %109 : vector<8x128xf32>
    %111 = math.exp %110 : vector<8x128xf32>
    %cst_37 = arith.constant 1.000000e+00 : f32
    %112 = vector.broadcast %cst_37 : f32 to vector<8x128xf32>
    %113 = arith.addf %112, %111 : vector<8x128xf32>
    %114 = arith.divf %112, %113 : vector<8x128xf32>
    %115 = vector.extract_strided_slice %108 {offsets = [0, 128], sizes = [8, 128], strides = [1, 1]} : vector<8x512xf32> to vector<8x128xf32>
    %116 = arith.negf %115 : vector<8x128xf32>
    %117 = math.exp %116 : vector<8x128xf32>
    %cst_38 = arith.constant 1.000000e+00 : f32
    %118 = vector.broadcast %cst_38 : f32 to vector<8x128xf32>
    %119 = arith.addf %118, %117 : vector<8x128xf32>
    %120 = arith.divf %118, %119 : vector<8x128xf32>
    %121 = vector.extract_strided_slice %108 {offsets = [0, 256], sizes = [8, 128], strides = [1, 1]} : vector<8x512xf32> to vector<8x128xf32>
    %122 = math.tanh %121 : vector<8x128xf32>
    %123 = vector.extract_strided_slice %108 {offsets = [0, 384], sizes = [8, 128], strides = [1, 1]} : vector<8x512xf32> to vector<8x128xf32>
    %124 = arith.negf %123 : vector<8x128xf32>
    %125 = math.exp %124 : vector<8x128xf32>
    %cst_39 = arith.constant 1.000000e+00 : f32
    %126 = vector.broadcast %cst_39 : f32 to vector<8x128xf32>
    %127 = arith.addf %126, %125 : vector<8x128xf32>
    %128 = arith.divf %126, %127 : vector<8x128xf32>
    %129 = arith.mulf %120, %99 : vector<8x128xf32>
    %130 = arith.mulf %114, %122 : vector<8x128xf32>
    %131 = arith.addf %129, %130 : vector<8x128xf32>
    %132 = math.tanh %131 : vector<8x128xf32>
    %133 = arith.mulf %128, %132 : vector<8x128xf32>
    %134 = vector.extract_strided_slice %133 {offsets = [0, 0], sizes = [8, 64], strides = [1, 1]} : vector<8x128xf32> to vector<8x64xf32>
    %c24_40 = arith.constant 24 : index
    %c0_41 = arith.constant 0 : index
    %135 = vector.load %arg8[%c24_40, %c0_41] : memref<64x128xf32, #tpu.memory_space<vmem>>, vector<8x64xf32>
    tpu.vector_store %arg8[%c24_40, %c0_41], %134 {strides = array<i32>} : memref<64x128xf32, #tpu.memory_space<vmem>>, vector<8x64xf32>,
    %136 = vector.extract_strided_slice %133 {offsets = [0, 64], sizes = [8, 64], strides = [1, 1]} : vector<8x128xf32> to vector<8x64xf32>
    %c32 = arith.constant 32 : index
    %c64_42 = arith.constant 64 : index
    %137 = vector.load %arg8[%c32, %c64_42] : memref<64x128xf32, #tpu.memory_space<vmem>>, vector<8x64xf32>
    tpu.vector_store %arg8[%c32, %c64_42], %136 {strides = array<i32>} : memref<64x128xf32, #tpu.memory_space<vmem>>, vector<8x64xf32>,
    %c32_43 = arith.constant 32 : index
    %c0_44 = arith.constant 0 : index
    %138 = vector.load %arg7[%c32_43, %c0_44] : memref<64x512xf32, #tpu.memory_space<vmem>>, vector<8x512xf32>
    %cst_45 = arith.constant dense<0.000000e+00> : vector<8x512xf32>
    %139 = tpu.matmul %133, %7, %cst_45 {dimension_numbers = #tpu.dot_dimension_numbers<[1], [0], [0], [1], [0, 0, 1, 1], [], []>} : vector<8x128xf32>, vector<128x512xf32>, vector<8x512xf32> -> vector<8x512xf32>
    %140 = arith.addf %138, %139 : vector<8x512xf32>
    %141 = vector.extract_strided_slice %140 {offsets = [0, 0], sizes = [8, 128], strides = [1, 1]} : vector<8x512xf32> to vector<8x128xf32>
    %142 = arith.negf %141 : vector<8x128xf32>
    %143 = math.exp %142 : vector<8x128xf32>
    %cst_46 = arith.constant 1.000000e+00 : f32
    %144 = vector.broadcast %cst_46 : f32 to vector<8x128xf32>
    %145 = arith.addf %144, %143 : vector<8x128xf32>
    %146 = arith.divf %144, %145 : vector<8x128xf32>
    %147 = vector.extract_strided_slice %140 {offsets = [0, 128], sizes = [8, 128], strides = [1, 1]} : vector<8x512xf32> to vector<8x128xf32>
    %148 = arith.negf %147 : vector<8x128xf32>
    %149 = math.exp %148 : vector<8x128xf32>
    %cst_47 = arith.constant 1.000000e+00 : f32
    %150 = vector.broadcast %cst_47 : f32 to vector<8x128xf32>
    %151 = arith.addf %150, %149 : vector<8x128xf32>
    %152 = arith.divf %150, %151 : vector<8x128xf32>
    %153 = vector.extract_strided_slice %140 {offsets = [0, 256], sizes = [8, 128], strides = [1, 1]} : vector<8x512xf32> to vector<8x128xf32>
    %154 = math.tanh %153 : vector<8x128xf32>
    %155 = vector.extract_strided_slice %140 {offsets = [0, 384], sizes = [8, 128], strides = [1, 1]} : vector<8x512xf32> to vector<8x128xf32>
    %156 = arith.negf %155 : vector<8x128xf32>
    %157 = math.exp %156 : vector<8x128xf32>
    %cst_48 = arith.constant 1.000000e+00 : f32
    %158 = vector.broadcast %cst_48 : f32 to vector<8x128xf32>
    %159 = arith.addf %158, %157 : vector<8x128xf32>
    %160 = arith.divf %158, %159 : vector<8x128xf32>
    %161 = arith.mulf %152, %131 : vector<8x128xf32>
    %162 = arith.mulf %146, %154 : vector<8x128xf32>
    %163 = arith.addf %161, %162 : vector<8x128xf32>
    %164 = math.tanh %163 : vector<8x128xf32>
    %165 = arith.mulf %160, %164 : vector<8x128xf32>
    %166 = vector.extract_strided_slice %165 {offsets = [0, 0], sizes = [8, 64], strides = [1, 1]} : vector<8x128xf32> to vector<8x64xf32>
    %c32_49 = arith.constant 32 : index
    %c0_50 = arith.constant 0 : index
    %167 = vector.load %arg8[%c32_49, %c0_50] : memref<64x128xf32, #tpu.memory_space<vmem>>, vector<8x64xf32>
    tpu.vector_store %arg8[%c32_49, %c0_50], %166 {strides = array<i32>} : memref<64x128xf32, #tpu.memory_space<vmem>>, vector<8x64xf32>,
    %168 = vector.extract_strided_slice %165 {offsets = [0, 64], sizes = [8, 64], strides = [1, 1]} : vector<8x128xf32> to vector<8x64xf32>
    %c24_51 = arith.constant 24 : index
    %c64_52 = arith.constant 64 : index
    %169 = vector.load %arg8[%c24_51, %c64_52] : memref<64x128xf32, #tpu.memory_space<vmem>>, vector<8x64xf32>
    tpu.vector_store %arg8[%c24_51, %c64_52], %168 {strides = array<i32>} : memref<64x128xf32, #tpu.memory_space<vmem>>, vector<8x64xf32>,
    %c40_53 = arith.constant 40 : index
    %c0_54 = arith.constant 0 : index
    %170 = vector.load %arg7[%c40_53, %c0_54] : memref<64x512xf32, #tpu.memory_space<vmem>>, vector<8x512xf32>
    %cst_55 = arith.constant dense<0.000000e+00> : vector<8x512xf32>
    %171 = tpu.matmul %165, %7, %cst_55 {dimension_numbers = #tpu.dot_dimension_numbers<[1], [0], [0], [1], [0, 0, 1, 1], [], []>} : vector<8x128xf32>, vector<128x512xf32>, vector<8x512xf32> -> vector<8x512xf32>
    %172 = arith.addf %170, %171 : vector<8x512xf32>
    %173 = vector.extract_strided_slice %172 {offsets = [0, 0], sizes = [8, 128], strides = [1, 1]} : vector<8x512xf32> to vector<8x128xf32>
    %174 = arith.negf %173 : vector<8x128xf32>
    %175 = math.exp %174 : vector<8x128xf32>
    %cst_56 = arith.constant 1.000000e+00 : f32
    %176 = vector.broadcast %cst_56 : f32 to vector<8x128xf32>
    %177 = arith.addf %176, %175 : vector<8x128xf32>
    %178 = arith.divf %176, %177 : vector<8x128xf32>
    %179 = vector.extract_strided_slice %172 {offsets = [0, 128], sizes = [8, 128], strides = [1, 1]} : vector<8x512xf32> to vector<8x128xf32>
    %180 = arith.negf %179 : vector<8x128xf32>
    %181 = math.exp %180 : vector<8x128xf32>
    %cst_57 = arith.constant 1.000000e+00 : f32
    %182 = vector.broadcast %cst_57 : f32 to vector<8x128xf32>
    %183 = arith.addf %182, %181 : vector<8x128xf32>
    %184 = arith.divf %182, %183 : vector<8x128xf32>
    %185 = vector.extract_strided_slice %172 {offsets = [0, 256], sizes = [8, 128], strides = [1, 1]} : vector<8x512xf32> to vector<8x128xf32>
    %186 = math.tanh %185 : vector<8x128xf32>
    %187 = vector.extract_strided_slice %172 {offsets = [0, 384], sizes = [8, 128], strides = [1, 1]} : vector<8x512xf32> to vector<8x128xf32>
    %188 = arith.negf %187 : vector<8x128xf32>
    %189 = math.exp %188 : vector<8x128xf32>
    %cst_58 = arith.constant 1.000000e+00 : f32
    %190 = vector.broadcast %cst_58 : f32 to vector<8x128xf32>
    %191 = arith.addf %190, %189 : vector<8x128xf32>
    %192 = arith.divf %190, %191 : vector<8x128xf32>
    %193 = arith.mulf %184, %163 : vector<8x128xf32>
    %194 = arith.mulf %178, %186 : vector<8x128xf32>
    %195 = arith.addf %193, %194 : vector<8x128xf32>
    %196 = math.tanh %195 : vector<8x128xf32>
    %197 = arith.mulf %192, %196 : vector<8x128xf32>
    %198 = vector.extract_strided_slice %197 {offsets = [0, 0], sizes = [8, 64], strides = [1, 1]} : vector<8x128xf32> to vector<8x64xf32>
    %c40_59 = arith.constant 40 : index
    %c0_60 = arith.constant 0 : index
    %199 = vector.load %arg8[%c40_59, %c0_60] : memref<64x128xf32, #tpu.memory_space<vmem>>, vector<8x64xf32>
    tpu.vector_store %arg8[%c40_59, %c0_60], %198 {strides = array<i32>} : memref<64x128xf32, #tpu.memory_space<vmem>>, vector<8x64xf32>,
    %200 = vector.extract_strided_slice %197 {offsets = [0, 64], sizes = [8, 64], strides = [1, 1]} : vector<8x128xf32> to vector<8x64xf32>
    %c16_61 = arith.constant 16 : index
    %c64_62 = arith.constant 64 : index
    %201 = vector.load %arg8[%c16_61, %c64_62] : memref<64x128xf32, #tpu.memory_space<vmem>>, vector<8x64xf32>
    tpu.vector_store %arg8[%c16_61, %c64_62], %200 {strides = array<i32>} : memref<64x128xf32, #tpu.memory_space<vmem>>, vector<8x64xf32>,
    %c48_63 = arith.constant 48 : index
    %c0_64 = arith.constant 0 : index
    %202 = vector.load %arg7[%c48_63, %c0_64] : memref<64x512xf32, #tpu.memory_space<vmem>>, vector<8x512xf32>
    %cst_65 = arith.constant dense<0.000000e+00> : vector<8x512xf32>
    %203 = tpu.matmul %197, %7, %cst_65 {dimension_numbers = #tpu.dot_dimension_numbers<[1], [0], [0], [1], [0, 0, 1, 1], [], []>} : vector<8x128xf32>, vector<128x512xf32>, vector<8x512xf32> -> vector<8x512xf32>
    %204 = arith.addf %202, %203 : vector<8x512xf32>
    %205 = vector.extract_strided_slice %204 {offsets = [0, 0], sizes = [8, 128], strides = [1, 1]} : vector<8x512xf32> to vector<8x128xf32>
    %206 = arith.negf %205 : vector<8x128xf32>
    %207 = math.exp %206 : vector<8x128xf32>
    %cst_66 = arith.constant 1.000000e+00 : f32
    %208 = vector.broadcast %cst_66 : f32 to vector<8x128xf32>
    %209 = arith.addf %208, %207 : vector<8x128xf32>
    %210 = arith.divf %208, %209 : vector<8x128xf32>
    %211 = vector.extract_strided_slice %204 {offsets = [0, 128], sizes = [8, 128], strides = [1, 1]} : vector<8x512xf32> to vector<8x128xf32>
    %212 = arith.negf %211 : vector<8x128xf32>
    %213 = math.exp %212 : vector<8x128xf32>
    %cst_67 = arith.constant 1.000000e+00 : f32
    %214 = vector.broadcast %cst_67 : f32 to vector<8x128xf32>
    %215 = arith.addf %214, %213 : vector<8x128xf32>
    %216 = arith.divf %214, %215 : vector<8x128xf32>
    %217 = vector.extract_strided_slice %204 {offsets = [0, 256], sizes = [8, 128], strides = [1, 1]} : vector<8x512xf32> to vector<8x128xf32>
    %218 = math.tanh %217 : vector<8x128xf32>
    %219 = vector.extract_strided_slice %204 {offsets = [0, 384], sizes = [8, 128], strides = [1, 1]} : vector<8x512xf32> to vector<8x128xf32>
    %220 = arith.negf %219 : vector<8x128xf32>
    %221 = math.exp %220 : vector<8x128xf32>
    %cst_68 = arith.constant 1.000000e+00 : f32
    %222 = vector.broadcast %cst_68 : f32 to vector<8x128xf32>
    %223 = arith.addf %222, %221 : vector<8x128xf32>
    %224 = arith.divf %222, %223 : vector<8x128xf32>
    %225 = arith.mulf %216, %195 : vector<8x128xf32>
    %226 = arith.mulf %210, %218 : vector<8x128xf32>
    %227 = arith.addf %225, %226 : vector<8x128xf32>
    %228 = math.tanh %227 : vector<8x128xf32>
    %229 = arith.mulf %224, %228 : vector<8x128xf32>
    %230 = vector.extract_strided_slice %229 {offsets = [0, 0], sizes = [8, 64], strides = [1, 1]} : vector<8x128xf32> to vector<8x64xf32>
    %c48_69 = arith.constant 48 : index
    %c0_70 = arith.constant 0 : index
    %231 = vector.load %arg8[%c48_69, %c0_70] : memref<64x128xf32, #tpu.memory_space<vmem>>, vector<8x64xf32>
    tpu.vector_store %arg8[%c48_69, %c0_70], %230 {strides = array<i32>} : memref<64x128xf32, #tpu.memory_space<vmem>>, vector<8x64xf32>,
    %232 = vector.extract_strided_slice %229 {offsets = [0, 64], sizes = [8, 64], strides = [1, 1]} : vector<8x128xf32> to vector<8x64xf32>
    %c8_71 = arith.constant 8 : index
    %c64_72 = arith.constant 64 : index
    %233 = vector.load %arg8[%c8_71, %c64_72] : memref<64x128xf32, #tpu.memory_space<vmem>>, vector<8x64xf32>
    tpu.vector_store %arg8[%c8_71, %c64_72], %232 {strides = array<i32>} : memref<64x128xf32, #tpu.memory_space<vmem>>, vector<8x64xf32>,
    %c56_73 = arith.constant 56 : index
    %c0_74 = arith.constant 0 : index
    %234 = vector.load %arg7[%c56_73, %c0_74] : memref<64x512xf32, #tpu.memory_space<vmem>>, vector<8x512xf32>
    %cst_75 = arith.constant dense<0.000000e+00> : vector<8x512xf32>
    %235 = tpu.matmul %229, %7, %cst_75 {dimension_numbers = #tpu.dot_dimension_numbers<[1], [0], [0], [1], [0, 0, 1, 1], [], []>} : vector<8x128xf32>, vector<128x512xf32>, vector<8x512xf32> -> vector<8x512xf32>
    %236 = arith.addf %234, %235 : vector<8x512xf32>
    %237 = vector.extract_strided_slice %236 {offsets = [0, 0], sizes = [8, 128], strides = [1, 1]} : vector<8x512xf32> to vector<8x128xf32>
    %238 = arith.negf %237 : vector<8x128xf32>
    %239 = math.exp %238 : vector<8x128xf32>
    %cst_76 = arith.constant 1.000000e+00 : f32
    %240 = vector.broadcast %cst_76 : f32 to vector<8x128xf32>
    %241 = arith.addf %240, %239 : vector<8x128xf32>
    %242 = arith.divf %240, %241 : vector<8x128xf32>
    %243 = vector.extract_strided_slice %236 {offsets = [0, 128], sizes = [8, 128], strides = [1, 1]} : vector<8x512xf32> to vector<8x128xf32>
    %244 = arith.negf %243 : vector<8x128xf32>
    %245 = math.exp %244 : vector<8x128xf32>
    %cst_77 = arith.constant 1.000000e+00 : f32
    %246 = vector.broadcast %cst_77 : f32 to vector<8x128xf32>
    %247 = arith.addf %246, %245 : vector<8x128xf32>
    %248 = arith.divf %246, %247 : vector<8x128xf32>
    %249 = vector.extract_strided_slice %236 {offsets = [0, 256], sizes = [8, 128], strides = [1, 1]} : vector<8x512xf32> to vector<8x128xf32>
    %250 = math.tanh %249 : vector<8x128xf32>
    %251 = vector.extract_strided_slice %236 {offsets = [0, 384], sizes = [8, 128], strides = [1, 1]} : vector<8x512xf32> to vector<8x128xf32>
    %252 = arith.negf %251 : vector<8x128xf32>
    %253 = math.exp %252 : vector<8x128xf32>
    %cst_78 = arith.constant 1.000000e+00 : f32
    %254 = vector.broadcast %cst_78 : f32 to vector<8x128xf32>
    %255 = arith.addf %254, %253 : vector<8x128xf32>
    %256 = arith.divf %254, %255 : vector<8x128xf32>
    %257 = arith.mulf %248, %227 : vector<8x128xf32>
    %258 = arith.mulf %242, %250 : vector<8x128xf32>
    %259 = arith.addf %257, %258 : vector<8x128xf32>
    %260 = math.tanh %259 : vector<8x128xf32>
    %261 = arith.mulf %256, %260 : vector<8x128xf32>
    %262 = vector.extract_strided_slice %261 {offsets = [0, 0], sizes = [8, 64], strides = [1, 1]} : vector<8x128xf32> to vector<8x64xf32>
    %c56_79 = arith.constant 56 : index
    %c0_80 = arith.constant 0 : index
    %263 = vector.load %arg8[%c56_79, %c0_80] : memref<64x128xf32, #tpu.memory_space<vmem>>, vector<8x64xf32>
    tpu.vector_store %arg8[%c56_79, %c0_80], %262 {strides = array<i32>} : memref<64x128xf32, #tpu.memory_space<vmem>>, vector<8x64xf32>,
    %264 = vector.extract_strided_slice %261 {offsets = [0, 64], sizes = [8, 64], strides = [1, 1]} : vector<8x128xf32> to vector<8x64xf32>
    %c0_81 = arith.constant 0 : index
    %c64_82 = arith.constant 64 : index
    %265 = vector.load %arg8[%c0_81, %c64_82] : memref<64x128xf32, #tpu.memory_space<vmem>>, vector<8x64xf32>
    tpu.vector_store %arg8[%c0_81, %c64_82], %264 {strides = array<i32>} : memref<64x128xf32, #tpu.memory_space<vmem>>, vector<8x64xf32>,
    %c0_83 = arith.constant 0 : index
    %c0_84 = arith.constant 0 : index
    %266 = vector.load %arg8[%c0_83, %c0_84] : memref<64x128xf32, #tpu.memory_space<vmem>>, vector<64x128xf32>
    %c0_85 = arith.constant 0 : index
    %c0_86 = arith.constant 0 : index
    %267 = vector.load %arg4[%c0_85, %c0_86] : memref<128x128xf32, #tpu.memory_space<vmem>>, vector<128x128xf32>
    %cst_87 = arith.constant dense<0.000000e+00> : vector<64x128xf32>
    %268 = tpu.matmul %266, %267, %cst_87 {dimension_numbers = #tpu.dot_dimension_numbers<[1], [0], [0], [1], [0, 0, 1, 1], [], []>} : vector<64x128xf32>, vector<128x128xf32>, vector<64x128xf32> -> vector<64x128xf32>
    %c0_88 = arith.constant 0 : index
    %c0_89 = arith.constant 0 : index
    %269 = vector.load %arg5[%c0_88, %c0_89] : memref<1x128xf32, #tpu.memory_space<vmem>>, vector<1x128xf32>
    %270 = vector.broadcast %269 : vector<1x128xf32> to vector<64x128xf32>
    %271 = arith.addf %268, %270 : vector<64x128xf32>
    %c0_90 = arith.constant 0 : index
    %c0_91 = arith.constant 0 : index
    %272 = vector.load %arg6[%c0_90, %c0_91] : memref<64x128xf32, #tpu.memory_space<vmem>>, vector<64x128xf32>
    tpu.vector_store %arg6[%c0_90, %c0_91], %271 {strides = array<i32>} : memref<64x128xf32, #tpu.memory_space<vmem>>, vector<64x128xf32>,
    return
  }
}

</mosaic_0001>

<llo_original>
// kernel: tpu_custom_call.1
$region0: #{tpu_custom_call.1}
  #allocation0 [shape = 'u32[]', space=smem, size = 0x4, offset = 0x4, fixed_abs, tag = 'smem constant byte address 0x4 - core index']
  #allocation1 [shape = 'u32[144,128]{1,0:T(1,128)}', space=vmem, size = 0x12000, scoped, tag = 'internal scratch']
  #allocation2 [shape = 'f32[64,512]{1,0:T(8,128)}', space=vmem, size = 0x20000, scoped, tag = 'scratch operand']
  #allocation3 [shape = 'f32[64,128]{1,0:T(8,128)}', space=vmem, size = 0x8000, scoped, tag = 'scratch operand']
  %s0 = inlined_call_operand.hbm [shape: f32[64,64], index: 0, kind: input, shape index: {}]
  %s1 = inlined_call_operand.hbm [shape: f32[64,512], index: 1, kind: input, shape index: {}]
  %s2 = inlined_call_operand.hbm [shape: f32[128,512], index: 2, kind: input, shape index: {}]
  %s3 = inlined_call_operand.vmem [shape: f32[1,512], index: 3, kind: input, shape index: {}]
  %s4 = inlined_call_operand.hbm [shape: f32[128,128], index: 4, kind: input, shape index: {}]
  %s5 = inlined_call_operand.vmem [shape: f32[1,128], index: 5, kind: input, shape index: {}]
  %s6 = inlined_call_operand.hbm [shape: f32[64,128], index: 6, kind: output, shape index: {}]
  %s7 = sld [smem:[#allocation0]]
  $region50: #{tpu_custom_call.1} parent=0
    _
  %s9 = ssub.s32 1, %s7
  %s10 = scalar_select 0, %s9, %s7
  $region1: #{tpu_custom_call.1} parent=0
    #allocation4 [shape = 'u8[32768]{0}', space=vmem, size = 0x8000, scoped, tag = 'input window, operand 0, single buffered']
    #allocation5 [shape = 's32[1]{0}', space=sflag, size = 0x4, scoped, tag = 'scoped memory for tpu_custom_call.1']
    #allocation6 [shape = 's32[1]{0}', space=sflag, size = 0x4, scoped, tag = 'scoped memory for tpu_custom_call.1']
    #allocation7 [shape = 'u8[131072]{0}', space=vmem, size = 0x20000, scoped, tag = 'input window, operand 1, single buffered']
    #allocation8 [shape = 's32[1]{0}', space=sflag, size = 0x4, scoped, tag = 'scoped memory for tpu_custom_call.1']
    #allocation9 [shape = 'u8[262144]{0}', space=vmem, size = 0x40000, scoped, tag = 'input window, operand 2, single buffered']
    #allocation10 [shape = 'u8[65536]{0}', space=vmem, size = 0x10000, scoped, tag = 'input window, operand 4, single buffered']
    #allocation11 [shape = 's32[1]{0}', space=sflag, size = 0x4, scoped, tag = 'scoped memory for tpu_custom_call.1']
    #allocation12 [shape = 'u8[32768]{0}', space=vmem, size = 0x8000, scoped, tag = 'output window, operand 0, single buffered']
    %11 = vsyncpa [#allocation5], 0
    %12 = vsyncpa [#allocation8], 0
    %13 = vsyncpa [#allocation11], 0
    %14 = vsyncpa [#allocation6], 0
    // Predicated region
    $region2: #{tpu_custom_call.1} parent=1 // pred_check
      _
    $region3: #{tpu_custom_call.1} parent=1 // pred_check_branch
      %16 = sbr.rel (0) target = $region5
    $region4: #{tpu_custom_call.1} parent=1 // pred_region
      %s18 = ssub.s32 1024, 1024
      %19 = vsyncadd [#allocation5], %s18
      %s20 = sshll.u32 [#allocation4], 4
      %s21 = int_to_ptr.vmem [resolvable:$true] %s20
      %26 = dma.hbm_to_vmem [thread:$0]  %s0, 1024, %s21, [#allocation5], 128, 128, 8
    $region5: #{tpu_custom_call.1} parent=1 // pred_fallthru
      _
    // Predicated region
    $region6: #{tpu_custom_call.1} parent=1 // pred_check
      _
    $region7: #{tpu_custom_call.1} parent=1 // pred_check_branch
      %28 = sbr.rel (0) target = $region9
    $region8: #{tpu_custom_call.1} parent=1 // pred_region
      %s30 = ssub.s32 4096, 4096
      %31 = vsyncadd [#allocation8], %s30
      %s32 = sshll.u32 [#allocation7], 4
      %s33 = int_to_ptr.vmem [resolvable:$true] %s32
      %38 = dma.hbm_to_vmem [thread:$0]  %s1, 4096, %s33, [#allocation8], 512, 512, 32
    $region9: #{tpu_custom_call.1} parent=1 // pred_fallthru
      _
    // Predicated region
    $region10: #{tpu_custom_call.1} parent=1 // pred_check
      _
    $region11: #{tpu_custom_call.1} parent=1 // pred_check_branch
      %40 = sbr.rel (0) target = $region13
    $region12: #{tpu_custom_call.1} parent=1 // pred_region
      %s42 = ssub.s32 8192, 8192
      %43 = vsyncadd [#allocation8], %s42
      %s44 = sshll.u32 [#allocation9], 4
      %s45 = int_to_ptr.vmem [resolvable:$true] %s44
      %50 = dma.hbm_to_vmem [thread:$0]  %s2, 8192, %s45, [#allocation8], 512, 512, 32
    $region13: #{tpu_custom_call.1} parent=1 // pred_fallthru
      _
    // Predicated region
    $region14: #{tpu_custom_call.1} parent=1 // pred_check
      _
    $region15: #{tpu_custom_call.1} parent=1 // pred_check_branch
      %52 = sbr.rel (0) target = $region17
    $region16: #{tpu_custom_call.1} parent=1 // pred_region
      _
    $region17: #{tpu_custom_call.1} parent=1 // pred_fallthru
      _
    // Predicated region
    $region18: #{tpu_custom_call.1} parent=1 // pred_check
      _
    $region19: #{tpu_custom_call.1} parent=1 // pred_check_branch
      %54 = sbr.rel (0) target = $region21
    $region20: #{tpu_custom_call.1} parent=1 // pred_region
      %s56 = ssub.s32 2048, 2048
      %57 = vsyncadd [#allocation11], %s56
      %s58 = sshll.u32 [#allocation10], 4
      %s59 = int_to_ptr.vmem [resolvable:$true] %s58
      %64 = dma.hbm_to_vmem [thread:$0]  %s4, 2048, %s59, [#allocation11], 128, 128, 8
    $region21: #{tpu_custom_call.1} parent=1 // pred_fallthru
      _
    // Predicated region
    $region22: #{tpu_custom_call.1} parent=1 // pred_check
      _
    $region23: #{tpu_custom_call.1} parent=1 // pred_check_branch
      %66 = sbr.rel (0) target = $region25
    $region24: #{tpu_custom_call.1} parent=1 // pred_region
      _
    $region25: #{tpu_custom_call.1} parent=1 // pred_fallthru
      _
    // Predicated region
    $region26: #{tpu_custom_call.1} parent=1 // pred_check
      _
    $region27: #{tpu_custom_call.1} parent=1 // pred_check_branch
      %68 = sbr.rel (0) target = $region29
    $region28: #{tpu_custom_call.1} parent=1 // pred_region
      %69 = dma.done [#allocation5], 1024
    $region29: #{tpu_custom_call.1} parent=1 // pred_fallthru
      _
    // Predicated region
    $region30: #{tpu_custom_call.1} parent=1 // pred_check
      _
    $region31: #{tpu_custom_call.1} parent=1 // pred_check_branch
      %71 = sbr.rel (0) target = $region33
    $region32: #{tpu_custom_call.1} parent=1 // pred_region
      %72 = dma.done [#allocation8], 4096
    $region33: #{tpu_custom_call.1} parent=1 // pred_fallthru
      _
    // Predicated region
    $region34: #{tpu_custom_call.1} parent=1 // pred_check
      _
    $region35: #{tpu_custom_call.1} parent=1 // pred_check_branch
      %74 = sbr.rel (0) target = $region37
    $region36: #{tpu_custom_call.1} parent=1 // pred_region
      %75 = dma.done [#allocation8], 8192
    $region37: #{tpu_custom_call.1} parent=1 // pred_fallthru
      _
    // Predicated region
    $region38: #{tpu_custom_call.1} parent=1 // pred_check
      _
    $region39: #{tpu_custom_call.1} parent=1 // pred_check_branch
      %77 = sbr.rel (0) target = $region41
    $region40: #{tpu_custom_call.1} parent=1 // pred_region
      %78 = dma.done [#allocation11], 2048
    $region41: #{tpu_custom_call.1} parent=1 // pred_fallthru
      _
    %v79 = vld [vmem:[#allocation4] sm:$0xff]
    %v80 = vld [vmem:[#allocation4 + $0x8] sm:$0xff]
    %v81 = vld [vmem:[#allocation4 + $0x10] sm:$0xff]
    %v82 = vld [vmem:[#allocation4 + $0x18] sm:$0xff]
    %v83 = vld [vmem:[#allocation4 + $0x20] sm:$0xff]
    %v84 = vld [vmem:[#allocation4 + $0x28] sm:$0xff]
    %v85 = vld [vmem:[#allocation4 + $0x30] sm:$0xff]
    %v86 = vld [vmem:[#allocation4 + $0x38] sm:$0xff]
    %v87 = vld [vmem:[#allocation7] sm:$0xff]
    %v88 = vld [vmem:[#allocation7 + $0x8] sm:$0xff]
    %v89 = vld [vmem:[#allocation7 + $0x10] sm:$0xff]
    %v90 = vld [vmem:[#allocation7 + $0x18] sm:$0xff]
    %v91 = vld [vmem:[#allocation7 + $0x20] sm:$0xff]
    %v92 = vld [vmem:[#allocation7 + $0x28] sm:$0xff]
    %v93 = vld [vmem:[#allocation7 + $0x30] sm:$0xff]
    %v94 = vld [vmem:[#allocation7 + $0x38] sm:$0xff]
    %v95 = vld [vmem:[#allocation7 + $0x40] sm:$0xff]
    %v96 = vld [vmem:[#allocation7 + $0x48] sm:$0xff]
    %v97 = vld [vmem:[#allocation7 + $0x50] sm:$0xff]
    %v98 = vld [vmem:[#allocation7 + $0x58] sm:$0xff]
    %v99 = vld [vmem:[#allocation7 + $0x60] sm:$0xff]
    %v100 = vld [vmem:[#allocation7 + $0x68] sm:$0xff]
    %v101 = vld [vmem:[#allocation7 + $0x70] sm:$0xff]
    %v102 = vld [vmem:[#allocation7 + $0x78] sm:$0xff]
    %v103 = vld [vmem:[#allocation7 + $0x80] sm:$0xff]
    %v104 = vld [vmem:[#allocation7 + $0x88] sm:$0xff]
    %v105 = vld [vmem:[#allocation7 + $0x90] sm:$0xff]
    %v106 = vld [vmem:[#allocation7 + $0x98] sm:$0xff]
    %v107 = vld [vmem:[#allocation7 + $0xa0] sm:$0xff]
    %v108 = vld [vmem:[#allocation7 + $0xa8] sm:$0xff]
    %v109 = vld [vmem:[#allocation7 + $0xb0] sm:$0xff]
    %v110 = vld [vmem:[#allocation7 + $0xb8] sm:$0xff]
    %v111 = vld [vmem:[#allocation7 + $0xc0] sm:$0xff]
    %v112 = vld [vmem:[#allocation7 + $0xc8] sm:$0xff]
    %v113 = vld [vmem:[#allocation7 + $0xd0] sm:$0xff]
    %v114 = vld [vmem:[#allocation7 + $0xd8] sm:$0xff]
    %v115 = vld [vmem:[#allocation7 + $0xe0] sm:$0xff]
    %v116 = vld [vmem:[#allocation7 + $0xe8] sm:$0xff]
    %v117 = vld [vmem:[#allocation7 + $0xf0] sm:$0xff]
    %v118 = vld [vmem:[#allocation7 + $0xf8] sm:$0xff]
    %v119 = vld [vmem:[%s3] sm:$0xf]
    %v121 = vlaneseq
    %v122 = vshrl.u32 %v121, 7
    %v123 = vsub.s32 0, %v122
    %v124 = vrot.slane %v119, %v123
    %v125 = vlaneseq
    %v126 = vshrl.u32 %v125, 7
    %v127 = vsub.s32 1, %v126
    %v128 = vrot.slane %v119, %v127
    %v129 = vlaneseq
    %v130 = vshrl.u32 %v129, 7
    %v131 = vsub.s32 2, %v130
    %v132 = vrot.slane %v119, %v131
    %v133 = vlaneseq
    %v134 = vshrl.u32 %v133, 7
    %v135 = vsub.s32 3, %v134
    %v136 = vrot.slane %v119, %v135
    %vm141 = vcmask 523264
    %v143 = vsel %vm141, %v79, 0
    %v146 = vsel %vm141, %v80, 0
    %v149 = vsel %vm141, %v81, 0
    %v152 = vsel %vm141, %v82, 0
    %v155 = vsel %vm141, %v83, 0
    %v158 = vsel %vm141, %v84, 0
    %v161 = vsel %vm141, %v85, 0
    %v164 = vsel %vm141, %v86, 0
    %166 = vmatprep.subr.mxu0 %v88
    %167 = vmatpush1.msra.mxu0 %v87
    %168 = vmatprep.subr.mxu0 %v92
    %169 = vmatpush1.msra.mxu0 %v91
    %170 = vmatprep.subr.mxu0 %v96
    %171 = vmatpush1.msra.mxu0 %v95
    %172 = vmatprep.subr.mxu0 %v100
    %173 = vmatpush1.msra.mxu0 %v99
    %174 = vmatprep.subr.mxu0 %v104
    %175 = vmatpush1.msra.mxu0 %v103
    %176 = vmatprep.subr.mxu0 %v108
    %177 = vmatpush1.msra.mxu0 %v107
    %178 = vmatprep.subr.mxu0 %v112
    %179 = vmatpush1.msra.mxu0 %v111
    %180 = vmatprep.subr.mxu0 %v116
    %181 = vmatpush1.msra.mxu0 %v115
    %182 = vmatprep.subr.mxu0 0.0
    %183 = vmatpush1.msra.mxu0 0.0
    %184 = vmatprep.subr.mxu0 0.0
    %185 = vmatpush1.msra.mxu0 0.0
    %186 = vmatprep.subr.mxu0 0.0
    %187 = vmatpush1.msra.mxu0 0.0
    %188 = vmatprep.subr.mxu0 0.0
    %189 = vmatpush1.msra.mxu0 0.0
    %190 = vmatprep.subr.mxu0 0.0
    %191 = vmatpush1.msra.mxu0 0.0
    %192 = vmatprep.subr.mxu0 0.0
    %193 = vmatpush1.msra.mxu0 0.0
    %194 = vmatprep.subr.mxu0 0.0
    %195 = vmatpush1.msra.mxu0 0.0
    %196 = vmatprep.subr.mxu0 0.0
    %197 = vmatpush1.msra.mxu0 0.0
    %198 = vmatprep.subr.mxu0 0.0
    %199 = vmatpush1.msra.mxu0 0.0
    %200 = vmatprep.subr.mxu0 0.0
    %201 = vmatpush1.msra.mxu0 0.0
    %202 = vmatprep.subr.mxu0 0.0
    %203 = vmatpush1.msra.mxu0 0.0
    %204 = vmatprep.subr.mxu0 0.0
    %205 = vmatpush1.msra.mxu0 0.0
    %206 = vmatprep.subr.mxu0 0.0
    %207 = vmatpush1.msra.mxu0 0.0
    %208 = vmatprep.subr.mxu0 0.0
    %209 = vmatpush1.msra.mxu0 0.0
    %210 = vmatprep.subr.mxu0 0.0
    %211 = vmatpush1.msra.mxu0 0.0
    %212 = vmatprep.subr.mxu0 0.0
    %213 = vmatpush1.msra.mxu0 0.0
    %214 = vmatprep.subr.mxu0 0.0
    %215 = vmatpush1.msra.mxu0 0.0
    %216 = vmatprep.subr.mxu0 0.0
    %217 = vmatpush1.msra.mxu0 0.0
    %218 = vmatprep.subr.mxu0 0.0
    %219 = vmatpush1.msra.mxu0 0.0
    %220 = vmatprep.subr.mxu0 0.0
    %221 = vmatpush1.msra.mxu0 0.0
    %222 = vmatprep.subr.mxu0 0.0
    %223 = vmatpush1.msra.mxu0 0.0
    %224 = vmatprep.subr.mxu0 0.0
    %225 = vmatpush1.msra.mxu0 0.0
    %226 = vmatprep.subr.mxu0 0.0
    %227 = vmatpush1.msra.mxu0 0.0
    %228 = vmatprep.subr.mxu0 0.0
    %229 = vmatpush1.msra.mxu0 0.0
    %230 = vmatprep.mubr.f32.mxu0 0.0
    %231 = vmatmul.mubr.f32.gmra.mrb[0].mxu0 %v143
    %v232 = vpop.f32.mrb[0].mxu0
    %v233 = vadd.f32 %v124, %v232
    %v234 = vpop.f32.mrb[0].mxu0
    %v235 = vadd.f32 %v128, %v234
    %236 = vmatprep.mubr.f32.mxu0 0.0
    %237 = vmatmul.mubr.f32.gmra.mrb[0].mxu0 %v146
    %v238 = vpop.f32.mrb[0].mxu0
    %v239 = vadd.f32 %v124, %v238
    %v240 = vpop.f32.mrb[0].mxu0
    %v241 = vadd.f32 %v128, %v240
    %242 = vmatprep.mubr.f32.mxu0 0.0
    %243 = vmatmul.mubr.f32.gmra.mrb[0].mxu0 %v149
    %v244 = vpop.f32.mrb[0].mxu0
    %v245 = vadd.f32 %v124, %v244
    %v246 = vpop.f32.mrb[0].mxu0
    %v247 = vadd.f32 %v128, %v246
    %248 = vmatprep.mubr.f32.mxu0 0.0
    %249 = vmatmul.mubr.f32.gmra.mrb[0].mxu0 %v152
    %v250 = vpop.f32.mrb[0].mxu0
    %v251 = vadd.f32 %v124, %v250
    %v252 = vpop.f32.mrb[0].mxu0
    %v253 = vadd.f32 %v128, %v252
    %254 = vmatprep.mubr.f32.mxu0 0.0
    %255 = vmatmul.mubr.f32.gmra.mrb[0].mxu0 %v155
    %v256 = vpop.f32.mrb[0].mxu0
    %v257 = vadd.f32 %v124, %v256
    %v258 = vpop.f32.mrb[0].mxu0
    %v259 = vadd.f32 %v128, %v258
    %260 = vmatprep.mubr.f32.mxu0 0.0
    %261 = vmatmul.mubr.f32.gmra.mrb[0].mxu0 %v158
    %v262 = vpop.f32.mrb[0].mxu0
    %v263 = vadd.f32 %v124, %v262
    %v264 = vpop.f32.mrb[0].mxu0
    %v265 = vadd.f32 %v128, %v264
    %266 = vmatprep.mubr.f32.mxu0 0.0
    %267 = vmatmul.mubr.f32.gmra.mrb[0].mxu0 %v161
    %v268 = vpop.f32.mrb[0].mxu0
    %v269 = vadd.f32 %v124, %v268
    %v270 = vpop.f32.mrb[0].mxu0
    %v271 = vadd.f32 %v128, %v270
    %272 = vmatprep.mubr.f32.mxu0 0.0
    %273 = vmatmul.mubr.f32.gmra.mrb[0].mxu0 %v164
    %v274 = vpop.f32.mrb[0].mxu0
    %v275 = vadd.f32 %v124, %v274
    %v276 = vpop.f32.mrb[0].mxu0
    %v277 = vadd.f32 %v128, %v276
    %278 = vdwg.mxu0
    %279 = vmatprep.subr.mxu0 %v90
    %280 = vmatpush1.msra.mxu0 %v89
    %281 = vmatprep.subr.mxu0 %v94
    %282 = vmatpush1.msra.mxu0 %v93
    %283 = vmatprep.subr.mxu0 %v98
    %284 = vmatpush1.msra.mxu0 %v97
    %285 = vmatprep.subr.mxu0 %v102
    %286 = vmatpush1.msra.mxu0 %v101
    %287 = vmatprep.subr.mxu0 %v106
    %288 = vmatpush1.msra.mxu0 %v105
    %289 = vmatprep.subr.mxu0 %v110
    %290 = vmatpush1.msra.mxu0 %v109
    %291 = vmatprep.subr.mxu0 %v114
    %292 = vmatpush1.msra.mxu0 %v113
    %293 = vmatprep.subr.mxu0 %v118
    %294 = vmatpush1.msra.mxu0 %v117
    %295 = vmatprep.subr.mxu0 0.0
    %296 = vmatpush1.msra.mxu0 0.0
    %297 = vmatprep.subr.mxu0 0.0
    %298 = vmatpush1.msra.mxu0 0.0
    %299 = vmatprep.subr.mxu0 0.0
    %300 = vmatpush1.msra.mxu0 0.0
    %301 = vmatprep.subr.mxu0 0.0
    %302 = vmatpush1.msra.mxu0 0.0
    %303 = vmatprep.subr.mxu0 0.0
    %304 = vmatpush1.msra.mxu0 0.0
    %305 = vmatprep.subr.mxu0 0.0
    %306 = vmatpush1.msra.mxu0 0.0
    %307 = vmatprep.subr.mxu0 0.0
    %308 = vmatpush1.msra.mxu0 0.0
    %309 = vmatprep.subr.mxu0 0.0
    %310 = vmatpush1.msra.mxu0 0.0
    %311 = vmatprep.subr.mxu0 0.0
    %312 = vmatpush1.msra.mxu0 0.0
    %313 = vmatprep.subr.mxu0 0.0
    %314 = vmatpush1.msra.mxu0 0.0
    %315 = vmatprep.subr.mxu0 0.0
    %316 = vmatpush1.msra.mxu0 0.0
    %317 = vmatprep.subr.mxu0 0.0
    %318 = vmatpush1.msra.mxu0 0.0
    %319 = vmatprep.subr.mxu0 0.0
    %320 = vmatpush1.msra.mxu0 0.0
    %321 = vmatprep.subr.mxu0 0.0
    %322 = vmatpush1.msra.mxu0 0.0
    %323 = vmatprep.subr.mxu0 0.0
    %324 = vmatpush1.msra.mxu0 0.0
    %325 = vmatprep.subr.mxu0 0.0
    %326 = vmatpush1.msra.mxu0 0.0
    %327 = vmatprep.subr.mxu0 0.0
    %328 = vmatpush1.msra.mxu0 0.0
    %329 = vmatprep.subr.mxu0 0.0
    %330 = vmatpush1.msra.mxu0 0.0
    %331 = vmatprep.subr.mxu0 0.0
    %332 = vmatpush1.msra.mxu0 0.0
    %333 = vmatprep.subr.mxu0 0.0
    %334 = vmatpush1.msra.mxu0 0.0
    %335 = vmatprep.subr.mxu0 0.0
    %336 = vmatpush1.msra.mxu0 0.0
    %337 = vmatprep.subr.mxu0 0.0
    %338 = vmatpush1.msra.mxu0 0.0
    %339 = vmatprep.subr.mxu0 0.0
    %340 = vmatpush1.msra.mxu0 0.0
    %341 = vmatprep.subr.mxu0 0.0
    %342 = vmatpush1.msra.mxu0 0.0
    %343 = vmatprep.mubr.f32.mxu0 0.0
    %344 = vmatmul.mubr.f32.gmra.mrb[0].mxu0 %v143
    %v345 = vpop.f32.mrb[0].mxu0
    %v346 = vadd.f32 %v132, %v345
    %v347 = vpop.f32.mrb[0].mxu0
    %v348 = vadd.f32 %v136, %v347
    %349 = vmatprep.mubr.f32.mxu0 0.0
    %350 = vmatmul.mubr.f32.gmra.mrb[0].mxu0 %v146
    %v351 = vpop.f32.mrb[0].mxu0
    %v352 = vadd.f32 %v132, %v351
    %v353 = vpop.f32.mrb[0].mxu0
    %v354 = vadd.f32 %v136, %v353
    %355 = vmatprep.mubr.f32.mxu0 0.0
    %356 = vmatmul.mubr.f32.gmra.mrb[0].mxu0 %v149
    %v357 = vpop.f32.mrb[0].mxu0
    %v358 = vadd.f32 %v132, %v357
    %v359 = vpop.f32.mrb[0].mxu0
    %v360 = vadd.f32 %v136, %v359
    %361 = vmatprep.mubr.f32.mxu0 0.0
    %362 = vmatmul.mubr.f32.gmra.mrb[0].mxu0 %v152
    %v363 = vpop.f32.mrb[0].mxu0
    %v364 = vadd.f32 %v132, %v363
    %v365 = vpop.f32.mrb[0].mxu0
    %v366 = vadd.f32 %v136, %v365
    %367 = vmatprep.mubr.f32.mxu0 0.0
    %368 = vmatmul.mubr.f32.gmra.mrb[0].mxu0 %v155
    %v369 = vpop.f32.mrb[0].mxu0
    %v370 = vadd.f32 %v132, %v369
    %v371 = vpop.f32.mrb[0].mxu0
    %v372 = vadd.f32 %v136, %v371
    %373 = vmatprep.mubr.f32.mxu0 0.0
    %374 = vmatmul.mubr.f32.gmra.mrb[0].mxu0 %v158
    %v375 = vpop.f32.mrb[0].mxu0
    %v376 = vadd.f32 %v132, %v375
    %v377 = vpop.f32.mrb[0].mxu0
    %v378 = vadd.f32 %v136, %v377
    %379 = vmatprep.mubr.f32.mxu0 0.0
    %380 = vmatmul.mubr.f32.gmra.mrb[0].mxu0 %v161
    %v381 = vpop.f32.mrb[0].mxu0
    %v382 = vadd.f32 %v132, %v381
    %v383 = vpop.f32.mrb[0].mxu0
    %v384 = vadd.f32 %v136, %v383
    %385 = vmatprep.mubr.f32.mxu0 0.0
    %386 = vmatmul.mubr.f32.gmra.mrb[0].mxu0 %v164
    %v387 = vpop.f32.mrb[0].mxu0
    %v388 = vadd.f32 %v132, %v387
    %v389 = vpop.f32.mrb[0].mxu0
    %v390 = vadd.f32 %v136, %v389
    %391 = vdwg.mxu0
    %392 = vst [vmem:[#allocation2] sm:$0xff] %v233
    %393 = vst [vmem:[#allocation2 + $0x8] sm:$0xff] %v235
    %394 = vst [vmem:[#allocation2 + $0x10] sm:$0xff] %v346
    %395 = vst [vmem:[#allocation2 + $0x18] sm:$0xff] %v348
    %396 = vst [vmem:[#allocation2 + $0x20] sm:$0xff] %v239
    %397 = vst [vmem:[#allocation2 + $0x28] sm:$0xff] %v241
    %398 = vst [vmem:[#allocation2 + $0x30] sm:$0xff] %v352
    %399 = vst [vmem:[#allocation2 + $0x38] sm:$0xff] %v354
    %400 = vst [vmem:[#allocation2 + $0x40] sm:$0xff] %v245
    %401 = vst [vmem:[#allocation2 + $0x48] sm:$0xff] %v247
    %402 = vst [vmem:[#allocation2 + $0x50] sm:$0xff] %v358
    %403 = vst [vmem:[#allocation2 + $0x58] sm:$0xff] %v360
    %404 = vst [vmem:[#allocation2 + $0x60] sm:$0xff] %v251
    %405 = vst [vmem:[#allocation2 + $0x68] sm:$0xff] %v253
    %406 = vst [vmem:[#allocation2 + $0x70] sm:$0xff] %v364
    %407 = vst [vmem:[#allocation2 + $0x78] sm:$0xff] %v366
    %408 = vst [vmem:[#allocation2 + $0x80] sm:$0xff] %v257
    %409 = vst [vmem:[#allocation2 + $0x88] sm:$0xff] %v259
    %410 = vst [vmem:[#allocation2 + $0x90] sm:$0xff] %v370
    %411 = vst [vmem:[#allocation2 + $0x98] sm:$0xff] %v372
    %412 = vst [vmem:[#allocation2 + $0xa0] sm:$0xff] %v263
    %413 = vst [vmem:[#allocation2 + $0xa8] sm:$0xff] %v265
    %414 = vst [vmem:[#allocation2 + $0xb0] sm:$0xff] %v376
    %415 = vst [vmem:[#allocation2 + $0xb8] sm:$0xff] %v378
    %416 = vst [vmem:[#allocation2 + $0xc0] sm:$0xff] %v269
    %417 = vst [vmem:[#allocation2 + $0xc8] sm:$0xff] %v271
    %418 = vst [vmem:[#allocation2 + $0xd0] sm:$0xff] %v382
    %419 = vst [vmem:[#allocation2 + $0xd8] sm:$0xff] %v384
    %420 = vst [vmem:[#allocation2 + $0xe0] sm:$0xff] %v275
    %421 = vst [vmem:[#allocation2 + $0xe8] sm:$0xff] %v277
    %422 = vst [vmem:[#allocation2 + $0xf0] sm:$0xff] %v388
    %423 = vst [vmem:[#allocation2 + $0xf8] sm:$0xff] %v390
    %v424 = vld [vmem:[#allocation9] sm:$0xff]
    %v425 = vld [vmem:[#allocation9 + $0x8] sm:$0xff]
    %v426 = vld [vmem:[#allocation9 + $0x10] sm:$0xff]
    %v427 = vld [vmem:[#allocation9 + $0x18] sm:$0xff]
    %v428 = vld [vmem:[#allocation9 + $0x20] sm:$0xff]
    %v429 = vld [vmem:[#allocation9 + $0x28] sm:$0xff]
    %v430 = vld [vmem:[#allocation9 + $0x30] sm:$0xff]
    %v431 = vld [vmem:[#allocation9 + $0x38] sm:$0xff]
    %v432 = vld [vmem:[#allocation9 + $0x40] sm:$0xff]
    %v433 = vld [vmem:[#allocation9 + $0x48] sm:$0xff]
    %v434 = vld [vmem:[#allocation9 + $0x50] sm:$0xff]
    %v435 = vld [vmem:[#allocation9 + $0x58] sm:$0xff]
    %v436 = vld [vmem:[#allocation9 + $0x60] sm:$0xff]
    %v437 = vld [vmem:[#allocation9 + $0x68] sm:$0xff]
    %v438 = vld [vmem:[#allocation9 + $0x70] sm:$0xff]
    %v439 = vld [vmem:[#allocation9 + $0x78] sm:$0xff]
    %v440 = vld [vmem:[#allocation9 + $0x80] sm:$0xff]
    %v441 = vld [vmem:[#allocation9 + $0x88] sm:$0xff]
    %v442 = vld [vmem:[#allocation9 + $0x90] sm:$0xff]
    %v443 = vld [vmem:[#allocation9 + $0x98] sm:$0xff]
    %v444 = vld [vmem:[#allocation9 + $0xa0] sm:$0xff]
    %v445 = vld [vmem:[#allocation9 + $0xa8] sm:$0xff]
    %v446 = vld [vmem:[#allocation9 + $0xb0] sm:$0xff]
    %v447 = vld [vmem:[#allocation9 + $0xb8] sm:$0xff]
    %v448 = vld [vmem:[#allocation9 + $0xc0] sm:$0xff]
    %v449 = vld [vmem:[#allocation9 + $0xc8] sm:$0xff]
    %v450 = vld [vmem:[#allocation9 + $0xd0] sm:$0xff]
    %v451 = vld [vmem:[#allocation9 + $0xd8] sm:$0xff]
    %v452 = vld [vmem:[#allocation9 + $0xe0] sm:$0xff]
    %v453 = vld [vmem:[#allocation9 + $0xe8] sm:$0xff]
    %v454 = vld [vmem:[#allocation9 + $0xf0] sm:$0xff]
    %v455 = vld [vmem:[#allocation9 + $0xf8] sm:$0xff]
    %v456 = vld [vmem:[#allocation9 + $0x100] sm:$0xff]
    %v457 = vld [vmem:[#allocation9 + $0x108] sm:$0xff]
    %v458 = vld [vmem:[#allocation9 + $0x110] sm:$0xff]
    %v459 = vld [vmem:[#allocation9 + $0x118] sm:$0xff]
    %v460 = vld [vmem:[#allocation9 + $0x120] sm:$0xff]
    %v461 = vld [vmem:[#allocation9 + $0x128] sm:$0xff]
    %v462 = vld [vmem:[#allocation9 + $0x130] sm:$0xff]
    %v463 = vld [vmem:[#allocation9 + $0x138] sm:$0xff]
    %v464 = vld [vmem:[#allocation9 + $0x140] sm:$0xff]
    %v465 = vld [vmem:[#allocation9 + $0x148] sm:$0xff]
    %v466 = vld [vmem:[#allocation9 + $0x150] sm:$0xff]
    %v467 = vld [vmem:[#allocation9 + $0x158] sm:$0xff]
    %v468 = vld [vmem:[#allocation9 + $0x160] sm:$0xff]
    %v469 = vld [vmem:[#allocation9 + $0x168] sm:$0xff]
    %v470 = vld [vmem:[#allocation9 + $0x170] sm:$0xff]
    %v471 = vld [vmem:[#allocation9 + $0x178] sm:$0xff]
    %v472 = vld [vmem:[#allocation9 + $0x180] sm:$0xff]
    %v473 = vld [vmem:[#allocation9 + $0x188] sm:$0xff]
    %v474 = vld [vmem:[#allocation9 + $0x190] sm:$0xff]
    %v475 = vld [vmem:[#allocation9 + $0x198] sm:$0xff]
    %v476 = vld [vmem:[#allocation9 + $0x1a0] sm:$0xff]
    %v477 = vld [vmem:[#allocation9 + $0x1a8] sm:$0xff]
    %v478 = vld [vmem:[#allocation9 + $0x1b0] sm:$0xff]
    %v479 = vld [vmem:[#allocation9 + $0x1b8] sm:$0xff]
    %v480 = vld [vmem:[#allocation9 + $0x1c0] sm:$0xff]
    %v481 = vld [vmem:[#allocation9 + $0x1c8] sm:$0xff]
    %v482 = vld [vmem:[#allocation9 + $0x1d0] sm:$0xff]
    %v483 = vld [vmem:[#allocation9 + $0x1d8] sm:$0xff]
    %v484 = vld [vmem:[#allocation9 + $0x1e0] sm:$0xff]
    %v485 = vld [vmem:[#allocation9 + $0x1e8] sm:$0xff]
    %v486 = vld [vmem:[#allocation9 + $0x1f0] sm:$0xff]
    %v487 = vld [vmem:[#allocation9 + $0x1f8] sm:$0xff]
    %v488 = vld [vmem:[#allocation2] sm:$0xff]
    %v489 = vld [vmem:[#allocation2 + $0x8] sm:$0xff]
    %v490 = vld [vmem:[#allocation2 + $0x10] sm:$0xff]
    %v491 = vld [vmem:[#allocation2 + $0x18] sm:$0xff]
    %492 = vmatprep.subr.mxu0 %v425
    %493 = vmatpush1.msra.mxu0 %v424
    %494 = vmatprep.subr.mxu0 %v429
    %495 = vmatpush1.msra.mxu0 %v428
    %496 = vmatprep.subr.mxu0 %v433
    %497 = vmatpush1.msra.mxu0 %v432
    %498 = vmatprep.subr.mxu0 %v437
    %499 = vmatpush1.msra.mxu0 %v436
    %500 = vmatprep.subr.mxu0 %v441
    %501 = vmatpush1.msra.mxu0 %v440
    %502 = vmatprep.subr.mxu0 %v445
    %503 = vmatpush1.msra.mxu0 %v444
    %504 = vmatprep.subr.mxu0 %v449
    %505 = vmatpush1.msra.mxu0 %v448
    %506 = vmatprep.subr.mxu0 %v453
    %507 = vmatpush1.msra.mxu0 %v452
    %508 = vmatprep.subr.mxu0 %v457
    %509 = vmatpush1.msra.mxu0 %v456
    %510 = vmatprep.subr.mxu0 %v461
    %511 = vmatpush1.msra.mxu0 %v460
    %512 = vmatprep.subr.mxu0 %v465
    %513 = vmatpush1.msra.mxu0 %v464
    %514 = vmatprep.subr.mxu0 %v469
    %515 = vmatpush1.msra.mxu0 %v468
    %516 = vmatprep.subr.mxu0 %v473
    %517 = vmatpush1.msra.mxu0 %v472
    %518 = vmatprep.subr.mxu0 %v477
    %519 = vmatpush1.msra.mxu0 %v476
    %520 = vmatprep.subr.mxu0 %v481
    %521 = vmatpush1.msra.mxu0 %v480
    %522 = vmatprep.subr.mxu0 %v485
    %523 = vmatpush1.msra.mxu0 %v484
    %524 = vmatprep.subr.mxu0 0.0
    %525 = vmatpush1.msra.mxu0 0.0
    %526 = vmatprep.subr.mxu0 0.0
    %527 = vmatpush1.msra.mxu0 0.0
    %528 = vmatprep.subr.mxu0 0.0
    %529 = vmatpush1.msra.mxu0 0.0
    %530 = vmatprep.subr.mxu0 0.0
    %531 = vmatpush1.msra.mxu0 0.0
    %532 = vmatprep.subr.mxu0 0.0
    %533 = vmatpush1.msra.mxu0 0.0
    %534 = vmatprep.subr.mxu0 0.0
    %535 = vmatpush1.msra.mxu0 0.0
    %536 = vmatprep.subr.mxu0 0.0
    %537 = vmatpush1.msra.mxu0 0.0
    %538 = vmatprep.subr.mxu0 0.0
    %539 = vmatpush1.msra.mxu0 0.0
    %540 = vmatprep.subr.mxu0 0.0
    %541 = vmatpush1.msra.mxu0 0.0
    %542 = vmatprep.subr.mxu0 0.0
    %543 = vmatpush1.msra.mxu0 0.0
    %544 = vmatprep.subr.mxu0 0.0
    %545 = vmatpush1.msra.mxu0 0.0
    %546 = vmatprep.subr.mxu0 0.0
    %547 = vmatpush1.msra.mxu0 0.0
    %548 = vmatprep.subr.mxu0 0.0
    %549 = vmatpush1.msra.mxu0 0.0
    %550 = vmatprep.subr.mxu0 0.0
    %551 = vmatpush1.msra.mxu0 0.0
    %552 = vmatprep.subr.mxu0 0.0
    %553 = vmatpush1.msra.mxu0 0.0
    %554 = vmatprep.subr.mxu0 0.0
    %555 = vmatpush1.msra.mxu0 0.0
    %556 = vmatprep.mubr.f32.mxu0 0.0
    %557 = vmatmul.mubr.f32.gmra.mrb[0].mxu0 0.0
    %v558 = vpop.f32.mrb[0].mxu0
    %v559 = vadd.f32 0.0, %v558
    %v560 = vpop.f32.mrb[0].mxu0
    %v561 = vadd.f32 0.0, %v560
    %562 = vdwg.mxu0
    %563 = vmatprep.subr.mxu0 %v427
    %564 = vmatpush1.msra.mxu0 %v426
    %565 = vmatprep.subr.mxu0 %v431
    %566 = vmatpush1.msra.mxu0 %v430
    %567 = vmatprep.subr.mxu0 %v435
    %568 = vmatpush1.msra.mxu0 %v434
    %569 = vmatprep.subr.mxu0 %v439
    %570 = vmatpush1.msra.mxu0 %v438
    %571 = vmatprep.subr.mxu0 %v443
    %572 = vmatpush1.msra.mxu0 %v442
    %573 = vmatprep.subr.mxu0 %v447
    %574 = vmatpush1.msra.mxu0 %v446
    %575 = vmatprep.subr.mxu0 %v451
    %576 = vmatpush1.msra.mxu0 %v450
    %577 = vmatprep.subr.mxu0 %v455
    %578 = vmatpush1.msra.mxu0 %v454
    %579 = vmatprep.subr.mxu0 %v459
    %580 = vmatpush1.msra.mxu0 %v458
    %581 = vmatprep.subr.mxu0 %v463
    %582 = vmatpush1.msra.mxu0 %v462
    %583 = vmatprep.subr.mxu0 %v467
    %584 = vmatpush1.msra.mxu0 %v466
    %585 = vmatprep.subr.mxu0 %v471
    %586 = vmatpush1.msra.mxu0 %v470
    %587 = vmatprep.subr.mxu0 %v475
    %588 = vmatpush1.msra.mxu0 %v474
    %589 = vmatprep.subr.mxu0 %v479
    %590 = vmatpush1.msra.mxu0 %v478
    %591 = vmatprep.subr.mxu0 %v483
    %592 = vmatpush1.msra.mxu0 %v482
    %593 = vmatprep.subr.mxu0 %v487
    %594 = vmatpush1.msra.mxu0 %v486
    %595 = vmatprep.subr.mxu0 0.0
    %596 = vmatpush1.msra.mxu0 0.0
    %597 = vmatprep.subr.mxu0 0.0
    %598 = vmatpush1.msra.mxu0 0.0
    %599 = vmatprep.subr.mxu0 0.0
    %600 = vmatpush1.msra.mxu0 0.0
    %601 = vmatprep.subr.mxu0 0.0
    %602 = vmatpush1.msra.mxu0 0.0
    %603 = vmatprep.subr.mxu0 0.0
    %604 = vmatpush1.msra.mxu0 0.0
    %605 = vmatprep.subr.mxu0 0.0
    %606 = vmatpush1.msra.mxu0 0.0
    %607 = vmatprep.subr.mxu0 0.0
    %608 = vmatpush1.msra.mxu0 0.0
    %609 = vmatprep.subr.mxu0 0.0
    %610 = vmatpush1.msra.mxu0 0.0
    %611 = vmatprep.subr.mxu0 0.0
    %612 = vmatpush1.msra.mxu0 0.0
    %613 = vmatprep.subr.mxu0 0.0
    %614 = vmatpush1.msra.mxu0 0.0
    %615 = vmatprep.subr.mxu0 0.0
    %616 = vmatpush1.msra.mxu0 0.0
    %617 = vmatprep.subr.mxu0 0.0
    %618 = vmatpush1.msra.mxu0 0.0
    %619 = vmatprep.subr.mxu0 0.0
    %620 = vmatpush1.msra.mxu0 0.0
    %621 = vmatprep.subr.mxu0 0.0
    %622 = vmatpush1.msra.mxu0 0.0
    %623 = vmatprep.subr.mxu0 0.0
    %624 = vmatpush1.msra.mxu0 0.0
    %625 = vmatprep.subr.mxu0 0.0
    %626 = vmatpush1.msra.mxu0 0.0
    %627 = vmatprep.mubr.f32.mxu0 0.0
    %628 = vmatmul.mubr.f32.gmra.mrb[0].mxu0 0.0
    %v629 = vpop.f32.mrb[0].mxu0
    %v630 = vadd.f32 0.0, %v629
    %v631 = vpop.f32.mrb[0].mxu0
    %v632 = vadd.f32 0.0, %v631
    %633 = vdwg.mxu0
    %v634 = vadd.f32 %v488, %v559
    %v635 = vadd.f32 %v489, %v561
    %v636 = vadd.f32 %v490, %v630
    %v637 = vadd.f32 %v491, %v632
    %v638 = vxor.u32 %v634, 2147483648
    %v639 = vmul.f32 %v638, 1.442695
    %v640 = vpow.pop %v639
    %v641 = vadd.f32 %v640, 1.0
    %v642 = vrcp.pop %v641
    %v643 = vmul.f32 1.0, %v642
    %v644 = vxor.u32 %v635, 2147483648
    %v645 = vmul.f32 %v644, 1.442695
    %v646 = vpow.pop %v645
    %v647 = vadd.f32 %v646, 1.0
    %v648 = vrcp.pop %v647
    %v649 = vmul.f32 1.0, %v648
    %v650 = vtanh.pop %v636
    %v651 = vxor.u32 %v637, 2147483648
    %v652 = vmul.f32 %v651, 1.442695
    %v653 = vpow.pop %v652
    %v654 = vadd.f32 %v653, 1.0
    %v655 = vrcp.pop %v654
    %v656 = vmul.f32 1.0, %v655
    %v657 = vmul.f32 %v649, 0.0
    %v658 = vmul.f32 %v643, %v650
    %v659 = vadd.f32 %v657, %v658
    %v660 = vtanh.pop %v659
    %v661 = vmul.f32 %v656, %v660
    %662 = vst.msk [vmem:[#allocation3] sm:$0xff] %vm141, %v661
    %vm663 = vcmask 1048064
    %664 = vst.msk [vmem:[#allocation3 + $0x38] sm:$0xff] %vm663, %v661
    %v665 = vld [vmem:[#allocation2 + $0x20] sm:$0xff]
    %v666 = vld [vmem:[#allocation2 + $0x28] sm:$0xff]
    %v667 = vld [vmem:[#allocation2 + $0x30] sm:$0xff]
    %v668 = vld [vmem:[#allocation2 + $0x38] sm:$0xff]
    %669 = vmatprep.subr.mxu0 %v425
    %670 = vmatpush1.msra.mxu0 %v424
    %671 = vmatprep.subr.mxu0 %v429
    %672 = vmatpush1.msra.mxu0 %v428
    %673 = vmatprep.subr.mxu0 %v433
    %674 = vmatpush1.msra.mxu0 %v432
    %675 = vmatprep.subr.mxu0 %v437
    %676 = vmatpush1.msra.mxu0 %v436
    %677 = vmatprep.subr.mxu0 %v441
    %678 = vmatpush1.msra.mxu0 %v440
    %679 = vmatprep.subr.mxu0 %v445
    %680 = vmatpush1.msra.mxu0 %v444
    %681 = vmatprep.subr.mxu0 %v449
    %682 = vmatpush1.msra.mxu0 %v448
    %683 = vmatprep.subr.mxu0 %v453
    %684 = vmatpush1.msra.mxu0 %v452
    %685 = vmatprep.subr.mxu0 %v457
    %686 = vmatpush1.msra.mxu0 %v456
    %687 = vmatprep.subr.mxu0 %v461
    %688 = vmatpush1.msra.mxu0 %v460
    %689 = vmatprep.subr.mxu0 %v465
    %690 = vmatpush1.msra.mxu0 %v464
    %691 = vmatprep.subr.mxu0 %v469
    %692 = vmatpush1.msra.mxu0 %v468
    %693 = vmatprep.subr.mxu0 %v473
    %694 = vmatpush1.msra.mxu0 %v472
    %695 = vmatprep.subr.mxu0 %v477
    %696 = vmatpush1.msra.mxu0 %v476
    %697 = vmatprep.subr.mxu0 %v481
    %698 = vmatpush1.msra.mxu0 %v480
    %699 = vmatprep.subr.mxu0 %v485
    %700 = vmatpush1.msra.mxu0 %v484
    %701 = vmatprep.subr.mxu0 0.0
    %702 = vmatpush1.msra.mxu0 0.0
    %703 = vmatprep.subr.mxu0 0.0
    %704 = vmatpush1.msra.mxu0 0.0
    %705 = vmatprep.subr.mxu0 0.0
    %706 = vmatpush1.msra.mxu0 0.0
    %707 = vmatprep.subr.mxu0 0.0
    %708 = vmatpush1.msra.mxu0 0.0
    %709 = vmatprep.subr.mxu0 0.0
    %710 = vmatpush1.msra.mxu0 0.0
    %711 = vmatprep.subr.mxu0 0.0
    %712 = vmatpush1.msra.mxu0 0.0
    %713 = vmatprep.subr.mxu0 0.0
    %714 = vmatpush1.msra.mxu0 0.0
    %715 = vmatprep.subr.mxu0 0.0
    %716 = vmatpush1.msra.mxu0 0.0
    %717 = vmatprep.subr.mxu0 0.0
    %718 = vmatpush1.msra.mxu0 0.0
    %719 = vmatprep.subr.mxu0 0.0
    %720 = vmatpush1.msra.mxu0 0.0
    %721 = vmatprep.subr.mxu0 0.0
    %722 = vmatpush1.msra.mxu0 0.0
    %723 = vmatprep.subr.mxu0 0.0
    %724 = vmatpush1.msra.mxu0 0.0
    %725 = vmatprep.subr.mxu0 0.0
    %726 = vmatpush1.msra.mxu0 0.0
    %727 = vmatprep.subr.mxu0 0.0
    %728 = vmatpush1.msra.mxu0 0.0
    %729 = vmatprep.subr.mxu0 0.0
    %730 = vmatpush1.msra.mxu0 0.0
    %731 = vmatprep.subr.mxu0 0.0
    %732 = vmatpush1.msra.mxu0 0.0
    %733 = vmatprep.mubr.f32.mxu0 0.0
    %734 = vmatmul.mubr.f32.gmra.mrb[0].mxu0 %v661
    %v735 = vpop.f32.mrb[0].mxu0
    %v736 = vadd.f32 0.0, %v735
    %v737 = vpop.f32.mrb[0].mxu0
    %v738 = vadd.f32 0.0, %v737
    %739 = vdwg.mxu0
    %740 = vmatprep.subr.mxu0 %v427
    %741 = vmatpush1.msra.mxu0 %v426
    %742 = vmatprep.subr.mxu0 %v431
    %743 = vmatpush1.msra.mxu0 %v430
    %744 = vmatprep.subr.mxu0 %v435
    %745 = vmatpush1.msra.mxu0 %v434
    %746 = vmatprep.subr.mxu0 %v439
    %747 = vmatpush1.msra.mxu0 %v438
    %748 = vmatprep.subr.mxu0 %v443
    %749 = vmatpush1.msra.mxu0 %v442
    %750 = vmatprep.subr.mxu0 %v447
    %751 = vmatpush1.msra.mxu0 %v446
    %752 = vmatprep.subr.mxu0 %v451
    %753 = vmatpush1.msra.mxu0 %v450
    %754 = vmatprep.subr.mxu0 %v455
    %755 = vmatpush1.msra.mxu0 %v454
    %756 = vmatprep.subr.mxu0 %v459
    %757 = vmatpush1.msra.mxu0 %v458
    %758 = vmatprep.subr.mxu0 %v463
    %759 = vmatpush1.msra.mxu0 %v462
    %760 = vmatprep.subr.mxu0 %v467
    %761 = vmatpush1.msra.mxu0 %v466
    %762 = vmatprep.subr.mxu0 %v471
    %763 = vmatpush1.msra.mxu0 %v470
    %764 = vmatprep.subr.mxu0 %v475
    %765 = vmatpush1.msra.mxu0 %v474
    %766 = vmatprep.subr.mxu0 %v479
    %767 = vmatpush1.msra.mxu0 %v478
    %768 = vmatprep.subr.mxu0 %v483
    %769 = vmatpush1.msra.mxu0 %v482
    %770 = vmatprep.subr.mxu0 %v487
    %771 = vmatpush1.msra.mxu0 %v486
    %772 = vmatprep.subr.mxu0 0.0
    %773 = vmatpush1.msra.mxu0 0.0
    %774 = vmatprep.subr.mxu0 0.0
    %775 = vmatpush1.msra.mxu0 0.0
    %776 = vmatprep.subr.mxu0 0.0
    %777 = vmatpush1.msra.mxu0 0.0
    %778 = vmatprep.subr.mxu0 0.0
    %779 = vmatpush1.msra.mxu0 0.0
    %780 = vmatprep.subr.mxu0 0.0
    %781 = vmatpush1.msra.mxu0 0.0
    %782 = vmatprep.subr.mxu0 0.0
    %783 = vmatpush1.msra.mxu0 0.0
    %784 = vmatprep.subr.mxu0 0.0
    %785 = vmatpush1.msra.mxu0 0.0
    %786 = vmatprep.subr.mxu0 0.0
    %787 = vmatpush1.msra.mxu0 0.0
    %788 = vmatprep.subr.mxu0 0.0
    %789 = vmatpush1.msra.mxu0 0.0
    %790 = vmatprep.subr.mxu0 0.0
    %791 = vmatpush1.msra.mxu0 0.0
    %792 = vmatprep.subr.mxu0 0.0
    %793 = vmatpush1.msra.mxu0 0.0
    %794 = vmatprep.subr.mxu0 0.0
    %795 = vmatpush1.msra.mxu0 0.0
    %796 = vmatprep.subr.mxu0 0.0
    %797 = vmatpush1.msra.mxu0 0.0
    %798 = vmatprep.subr.mxu0 0.0
    %799 = vmatpush1.msra.mxu0 0.0
    %800 = vmatprep.subr.mxu0 0.0
    %801 = vmatpush1.msra.mxu0 0.0
    %802 = vmatprep.subr.mxu0 0.0
    %803 = vmatpush1.msra.mxu0 0.0
    %804 = vmatprep.mubr.f32.mxu0 0.0
    %805 = vmatmul.mubr.f32.gmra.mrb[0].mxu0 %v661
    %v806 = vpop.f32.mrb[0].mxu0
    %v807 = vadd.f32 0.0, %v806
    %v808 = vpop.f32.mrb[0].mxu0
    %v809 = vadd.f32 0.0, %v808
    %810 = vdwg.mxu0
    %v811 = vadd.f32 %v665, %v736
    %v812 = vadd.f32 %v666, %v738
    %v813 = vadd.f32 %v667, %v807
    %v814 = vadd.f32 %v668, %v809
    %v815 = vxor.u32 %v811, 2147483648
    %v816 = vmul.f32 %v815, 1.442695
    %v817 = vpow.pop %v816
    %v818 = vadd.f32 %v817, 1.0
    %v819 = vrcp.pop %v818
    %v820 = vmul.f32 1.0, %v819
    %v821 = vxor.u32 %v812, 2147483648
    %v822 = vmul.f32 %v821, 1.442695
    %v823 = vpow.pop %v822
    %v824 = vadd.f32 %v823, 1.0
    %v825 = vrcp.pop %v824
    %v826 = vmul.f32 1.0, %v825
    %v827 = vtanh.pop %v813
    %v828 = vxor.u32 %v814, 2147483648
    %v829 = vmul.f32 %v828, 1.442695
    %v830 = vpow.pop %v829
    %v831 = vadd.f32 %v830, 1.0
    %v832 = vrcp.pop %v831
    %v833 = vmul.f32 1.0, %v832
    %v834 = vmul.f32 %v826, %v659
    %v835 = vmul.f32 %v820, %v827
    %v836 = vadd.f32 %v834, %v835
    %v837 = vtanh.pop %v836
    %v838 = vmul.f32 %v833, %v837
    %839 = vst.msk [vmem:[#allocation3 + $0x8] sm:$0xff] %vm141, %v838
    %840 = vst.msk [vmem:[#allocation3 + $0x30] sm:$0xff] %vm663, %v838
    %v841 = vld [vmem:[#allocation2 + $0x40] sm:$0xff]
    %v842 = vld [vmem:[#allocation2 + $0x48] sm:$0xff]
    %v843 = vld [vmem:[#allocation2 + $0x50] sm:$0xff]
    %v844 = vld [vmem:[#allocation2 + $0x58] sm:$0xff]
    %845 = vmatprep.subr.mxu0 %v425
    %846 = vmatpush1.msra.mxu0 %v424
    %847 = vmatprep.subr.mxu0 %v429
    %848 = vmatpush1.msra.mxu0 %v428
    %849 = vmatprep.subr.mxu0 %v433
    %850 = vmatpush1.msra.mxu0 %v432
    %851 = vmatprep.subr.mxu0 %v437
    %852 = vmatpush1.msra.mxu0 %v436
    %853 = vmatprep.subr.mxu0 %v441
    %854 = vmatpush1.msra.mxu0 %v440
    %855 = vmatprep.subr.mxu0 %v445
    %856 = vmatpush1.msra.mxu0 %v444
    %857 = vmatprep.subr.mxu0 %v449
    %858 = vmatpush1.msra.mxu0 %v448
    %859 = vmatprep.subr.mxu0 %v453
    %860 = vmatpush1.msra.mxu0 %v452
    %861 = vmatprep.subr.mxu0 %v457
    %862 = vmatpush1.msra.mxu0 %v456
    %863 = vmatprep.subr.mxu0 %v461
    %864 = vmatpush1.msra.mxu0 %v460
    %865 = vmatprep.subr.mxu0 %v465
    %866 = vmatpush1.msra.mxu0 %v464
    %867 = vmatprep.subr.mxu0 %v469
    %868 = vmatpush1.msra.mxu0 %v468
    %869 = vmatprep.subr.mxu0 %v473
    %870 = vmatpush1.msra.mxu0 %v472
    %871 = vmatprep.subr.mxu0 %v477
    %872 = vmatpush1.msra.mxu0 %v476
    %873 = vmatprep.subr.mxu0 %v481
    %874 = vmatpush1.msra.mxu0 %v480
    %875 = vmatprep.subr.mxu0 %v485
    %876 = vmatpush1.msra.mxu0 %v484
    %877 = vmatprep.subr.mxu0 0.0
    %878 = vmatpush1.msra.mxu0 0.0
    %879 = vmatprep.subr.mxu0 0.0
    %880 = vmatpush1.msra.mxu0 0.0
    %881 = vmatprep.subr.mxu0 0.0
    %882 = vmatpush1.msra.mxu0 0.0
    %883 = vmatprep.subr.mxu0 0.0
    %884 = vmatpush1.msra.mxu0 0.0
    %885 = vmatprep.subr.mxu0 0.0
    %886 = vmatpush1.msra.mxu0 0.0
    %887 = vmatprep.subr.mxu0 0.0
    %888 = vmatpush1.msra.mxu0 0.0
    %889 = vmatprep.subr.mxu0 0.0
    %890 = vmatpush1.msra.mxu0 0.0
    %891 = vmatprep.subr.mxu0 0.0
    %892 = vmatpush1.msra.mxu0 0.0
    %893 = vmatprep.subr.mxu0 0.0
    %894 = vmatpush1.msra.mxu0 0.0
    %895 = vmatprep.subr.mxu0 0.0
    %896 = vmatpush1.msra.mxu0 0.0
    %897 = vmatprep.subr.mxu0 0.0
    %898 = vmatpush1.msra.mxu0 0.0
    %899 = vmatprep.subr.mxu0 0.0
    %900 = vmatpush1.msra.mxu0 0.0
    %901 = vmatprep.subr.mxu0 0.0
    %902 = vmatpush1.msra.mxu0 0.0
    %903 = vmatprep.subr.mxu0 0.0
    %904 = vmatpush1.msra.mxu0 0.0
    %905 = vmatprep.subr.mxu0 0.0
    %906 = vmatpush1.msra.mxu0 0.0
    %907 = vmatprep.subr.mxu0 0.0
    %908 = vmatpush1.msra.mxu0 0.0
    %909 = vmatprep.mubr.f32.mxu0 0.0
    %910 = vmatmul.mubr.f32.gmra.mrb[0].mxu0 %v838
    %v911 = vpop.f32.mrb[0].mxu0
    %v912 = vadd.f32 0.0, %v911
    %v913 = vpop.f32.mrb[0].mxu0
    %v914 = vadd.f32 0.0, %v913
    %915 = vdwg.mxu0
    %916 = vmatprep.subr.mxu0 %v427
    %917 = vmatpush1.msra.mxu0 %v426
    %918 = vmatprep.subr.mxu0 %v431
    %919 = vmatpush1.msra.mxu0 %v430
    %920 = vmatprep.subr.mxu0 %v435
    %921 = vmatpush1.msra.mxu0 %v434
    %922 = vmatprep.subr.mxu0 %v439
    %923 = vmatpush1.msra.mxu0 %v438
    %924 = vmatprep.subr.mxu0 %v443
    %925 = vmatpush1.msra.mxu0 %v442
    %926 = vmatprep.subr.mxu0 %v447
    %927 = vmatpush1.msra.mxu0 %v446
    %928 = vmatprep.subr.mxu0 %v451
    %929 = vmatpush1.msra.mxu0 %v450
    %930 = vmatprep.subr.mxu0 %v455
    %931 = vmatpush1.msra.mxu0 %v454
    %932 = vmatprep.subr.mxu0 %v459
    %933 = vmatpush1.msra.mxu0 %v458
    %934 = vmatprep.subr.mxu0 %v463
    %935 = vmatpush1.msra.mxu0 %v462
    %936 = vmatprep.subr.mxu0 %v467
    %937 = vmatpush1.msra.mxu0 %v466
    %938 = vmatprep.subr.mxu0 %v471
    %939 = vmatpush1.msra.mxu0 %v470
    %940 = vmatprep.subr.mxu0 %v475
    %941 = vmatpush1.msra.mxu0 %v474
    %942 = vmatprep.subr.mxu0 %v479
    %943 = vmatpush1.msra.mxu0 %v478
    %944 = vmatprep.subr.mxu0 %v483
    %945 = vmatpush1.msra.mxu0 %v482
    %946 = vmatprep.subr.mxu0 %v487
    %947 = vmatpush1.msra.mxu0 %v486
    %948 = vmatprep.subr.mxu0 0.0
    %949 = vmatpush1.msra.mxu0 0.0
    %950 = vmatprep.subr.mxu0 0.0
    %951 = vmatpush1.msra.mxu0 0.0
    %952 = vmatprep.subr.mxu0 0.0
    %953 = vmatpush1.msra.mxu0 0.0
    %954 = vmatprep.subr.mxu0 0.0
    %955 = vmatpush1.msra.mxu0 0.0
    %956 = vmatprep.subr.mxu0 0.0
    %957 = vmatpush1.msra.mxu0 0.0
    %958 = vmatprep.subr.mxu0 0.0
    %959 = vmatpush1.msra.mxu0 0.0
    %960 = vmatprep.subr.mxu0 0.0
    %961 = vmatpush1.msra.mxu0 0.0
    %962 = vmatprep.subr.mxu0 0.0
    %963 = vmatpush1.msra.mxu0 0.0
    %964 = vmatprep.subr.mxu0 0.0
    %965 = vmatpush1.msra.mxu0 0.0
    %966 = vmatprep.subr.mxu0 0.0
    %967 = vmatpush1.msra.mxu0 0.0
    %968 = vmatprep.subr.mxu0 0.0
    %969 = vmatpush1.msra.mxu0 0.0
    %970 = vmatprep.subr.mxu0 0.0
    %971 = vmatpush1.msra.mxu0 0.0
    %972 = vmatprep.subr.mxu0 0.0
    %973 = vmatpush1.msra.mxu0 0.0
    %974 = vmatprep.subr.mxu0 0.0
    %975 = vmatpush1.msra.mxu0 0.0
    %976 = vmatprep.subr.mxu0 0.0
    %977 = vmatpush1.msra.mxu0 0.0
    %978 = vmatprep.subr.mxu0 0.0
    %979 = vmatpush1.msra.mxu0 0.0
    %980 = vmatprep.mubr.f32.mxu0 0.0
    %981 = vmatmul.mubr.f32.gmra.mrb[0].mxu0 %v838
    %v982 = vpop.f32.mrb[0].mxu0
    %v983 = vadd.f32 0.0, %v982
    %v984 = vpop.f32.mrb[0].mxu0
    %v985 = vadd.f32 0.0, %v984
    %986 = vdwg.mxu0
    %v987 = vadd.f32 %v841, %v912
    %v988 = vadd.f32 %v842, %v914
    %v989 = vadd.f32 %v843, %v983
    %v990 = vadd.f32 %v844, %v985
    %v991 = vxor.u32 %v987, 2147483648
    %v992 = vmul.f32 %v991, 1.442695
    %v993 = vpow.pop %v992
    %v994 = vadd.f32 %v993, 1.0
    %v995 = vrcp.pop %v994
    %v996 = vmul.f32 1.0, %v995
    %v997 = vxor.u32 %v988, 2147483648
    %v998 = vmul.f32 %v997, 1.442695
    %v999 = vpow.pop %v998
    %v1000 = vadd.f32 %v999, 1.0
    %v1001 = vrcp.pop %v1000
    %v1002 = vmul.f32 1.0, %v1001
    %v1003 = vtanh.pop %v989
    %v1004 = vxor.u32 %v990, 2147483648
    %v1005 = vmul.f32 %v1004, 1.442695
    %v1006 = vpow.pop %v1005
    %v1007 = vadd.f32 %v1006, 1.0
    %v1008 = vrcp.pop %v1007
    %v1009 = vmul.f32 1.0, %v1008
    %v1010 = vmul.f32 %v1002, %v836
    %v1011 = vmul.f32 %v996, %v1003
    %v1012 = vadd.f32 %v1010, %v1011
    %v1013 = vtanh.pop %v1012
    %v1014 = vmul.f32 %v1009, %v1013
    %1015 = vst.msk [vmem:[#allocation3 + $0x10] sm:$0xff] %vm141, %v1014
    %1016 = vst.msk [vmem:[#allocation3 + $0x28] sm:$0xff] %vm663, %v1014
    %v1017 = vld [vmem:[#allocation2 + $0x60] sm:$0xff]
    %v1018 = vld [vmem:[#allocation2 + $0x68] sm:$0xff]
    %v1019 = vld [vmem:[#allocation2 + $0x70] sm:$0xff]
    %v1020 = vld [vmem:[#allocation2 + $0x78] sm:$0xff]
    %1021 = vmatprep.subr.mxu0 %v425
    %1022 = vmatpush1.msra.mxu0 %v424
    %1023 = vmatprep.subr.mxu0 %v429
    %1024 = vmatpush1.msra.mxu0 %v428
    %1025 = vmatprep.subr.mxu0 %v433
    %1026 = vmatpush1.msra.mxu0 %v432
    %1027 = vmatprep.subr.mxu0 %v437
    %1028 = vmatpush1.msra.mxu0 %v436
    %1029 = vmatprep.subr.mxu0 %v441
    %1030 = vmatpush1.msra.mxu0 %v440
    %1031 = vmatprep.subr.mxu0 %v445
    %1032 = vmatpush1.msra.mxu0 %v444
    %1033 = vmatprep.subr.mxu0 %v449
    %1034 = vmatpush1.msra.mxu0 %v448
    %1035 = vmatprep.subr.mxu0 %v453
    %1036 = vmatpush1.msra.mxu0 %v452
    %1037 = vmatprep.subr.mxu0 %v457
    %1038 = vmatpush1.msra.mxu0 %v456
    %1039 = vmatprep.subr.mxu0 %v461
    %1040 = vmatpush1.msra.mxu0 %v460
    %1041 = vmatprep.subr.mxu0 %v465
    %1042 = vmatpush1.msra.mxu0 %v464
    %1043 = vmatprep.subr.mxu0 %v469
    %1044 = vmatpush1.msra.mxu0 %v468
    %1045 = vmatprep.subr.mxu0 %v473
    %1046 = vmatpush1.msra.mxu0 %v472
    %1047 = vmatprep.subr.mxu0 %v477
    %1048 = vmatpush1.msra.mxu0 %v476
    %1049 = vmatprep.subr.mxu0 %v481
    %1050 = vmatpush1.msra.mxu0 %v480
    %1051 = vmatprep.subr.mxu0 %v485
    %1052 = vmatpush1.msra.mxu0 %v484
    %1053 = vmatprep.subr.mxu0 0.0
    %1054 = vmatpush1.msra.mxu0 0.0
    %1055 = vmatprep.subr.mxu0 0.0
    %1056 = vmatpush1.msra.mxu0 0.0
    %1057 = vmatprep.subr.mxu0 0.0
    %1058 = vmatpush1.msra.mxu0 0.0
    %1059 = vmatprep.subr.mxu0 0.0
    %1060 = vmatpush1.msra.mxu0 0.0
    %1061 = vmatprep.subr.mxu0 0.0
    %1062 = vmatpush1.msra.mxu0 0.0
    %1063 = vmatprep.subr.mxu0 0.0
    %1064 = vmatpush1.msra.mxu0 0.0
    %1065 = vmatprep.subr.mxu0 0.0
    %1066 = vmatpush1.msra.mxu0 0.0
    %1067 = vmatprep.subr.mxu0 0.0
    %1068 = vmatpush1.msra.mxu0 0.0
    %1069 = vmatprep.subr.mxu0 0.0
    %1070 = vmatpush1.msra.mxu0 0.0
    %1071 = vmatprep.subr.mxu0 0.0
    %1072 = vmatpush1.msra.mxu0 0.0
    %1073 = vmatprep.subr.mxu0 0.0
    %1074 = vmatpush1.msra.mxu0 0.0
    %1075 = vmatprep.subr.mxu0 0.0
    %1076 = vmatpush1.msra.mxu0 0.0
    %1077 = vmatprep.subr.mxu0 0.0
    %1078 = vmatpush1.msra.mxu0 0.0
    %1079 = vmatprep.subr.mxu0 0.0
    %1080 = vmatpush1.msra.mxu0 0.0
    %1081 = vmatprep.subr.mxu0 0.0
    %1082 = vmatpush1.msra.mxu0 0.0
    %1083 = vmatprep.subr.mxu0 0.0
    %1084 = vmatpush1.msra.mxu0 0.0
    %1085 = vmatprep.mubr.f32.mxu0 0.0
    %1086 = vmatmul.mubr.f32.gmra.mrb[0].mxu0 %v1014
    %v1087 = vpop.f32.mrb[0].mxu0
    %v1088 = vadd.f32 0.0, %v1087
    %v1089 = vpop.f32.mrb[0].mxu0
    %v1090 = vadd.f32 0.0, %v1089
    %1091 = vdwg.mxu0
    %1092 = vmatprep.subr.mxu0 %v427
    %1093 = vmatpush1.msra.mxu0 %v426
    %1094 = vmatprep.subr.mxu0 %v431
    %1095 = vmatpush1.msra.mxu0 %v430
    %1096 = vmatprep.subr.mxu0 %v435
    %1097 = vmatpush1.msra.mxu0 %v434
    %1098 = vmatprep.subr.mxu0 %v439
    %1099 = vmatpush1.msra.mxu0 %v438
    %1100 = vmatprep.subr.mxu0 %v443
    %1101 = vmatpush1.msra.mxu0 %v442
    %1102 = vmatprep.subr.mxu0 %v447
    %1103 = vmatpush1.msra.mxu0 %v446
    %1104 = vmatprep.subr.mxu0 %v451
    %1105 = vmatpush1.msra.mxu0 %v450
    %1106 = vmatprep.subr.mxu0 %v455
    %1107 = vmatpush1.msra.mxu0 %v454
    %1108 = vmatprep.subr.mxu0 %v459
    %1109 = vmatpush1.msra.mxu0 %v458
    %1110 = vmatprep.subr.mxu0 %v463
    %1111 = vmatpush1.msra.mxu0 %v462
    %1112 = vmatprep.subr.mxu0 %v467
    %1113 = vmatpush1.msra.mxu0 %v466
    %1114 = vmatprep.subr.mxu0 %v471
    %1115 = vmatpush1.msra.mxu0 %v470
    %1116 = vmatprep.subr.mxu0 %v475
    %1117 = vmatpush1.msra.mxu0 %v474
    %1118 = vmatprep.subr.mxu0 %v479
    %1119 = vmatpush1.msra.mxu0 %v478
    %1120 = vmatprep.subr.mxu0 %v483
    %1121 = vmatpush1.msra.mxu0 %v482
    %1122 = vmatprep.subr.mxu0 %v487
    %1123 = vmatpush1.msra.mxu0 %v486
    %1124 = vmatprep.subr.mxu0 0.0
    %1125 = vmatpush1.msra.mxu0 0.0
    %1126 = vmatprep.subr.mxu0 0.0
    %1127 = vmatpush1.msra.mxu0 0.0
    %1128 = vmatprep.subr.mxu0 0.0
    %1129 = vmatpush1.msra.mxu0 0.0
    %1130 = vmatprep.subr.mxu0 0.0
    %1131 = vmatpush1.msra.mxu0 0.0
    %1132 = vmatprep.subr.mxu0 0.0
    %1133 = vmatpush1.msra.mxu0 0.0
    %1134 = vmatprep.subr.mxu0 0.0
    %1135 = vmatpush1.msra.mxu0 0.0
    %1136 = vmatprep.subr.mxu0 0.0
    %1137 = vmatpush1.msra.mxu0 0.0
    %1138 = vmatprep.subr.mxu0 0.0
    %1139 = vmatpush1.msra.mxu0 0.0
    %1140 = vmatprep.subr.mxu0 0.0
    %1141 = vmatpush1.msra.mxu0 0.0
    %1142 = vmatprep.subr.mxu0 0.0
    %1143 = vmatpush1.msra.mxu0 0.0
    %1144 = vmatprep.subr.mxu0 0.0
    %1145 = vmatpush1.msra.mxu0 0.0
    %1146 = vmatprep.subr.mxu0 0.0
    %1147 = vmatpush1.msra.mxu0 0.0
    %1148 = vmatprep.subr.mxu0 0.0
    %1149 = vmatpush1.msra.mxu0 0.0
    %1150 = vmatprep.subr.mxu0 0.0
    %1151 = vmatpush1.msra.mxu0 0.0
    %1152 = vmatprep.subr.mxu0 0.0
    %1153 = vmatpush1.msra.mxu0 0.0
    %1154 = vmatprep.subr.mxu0 0.0
    %1155 = vmatpush1.msra.mxu0 0.0
    %1156 = vmatprep.mubr.f32.mxu0 0.0
    %1157 = vmatmul.mubr.f32.gmra.mrb[0].mxu0 %v1014
    %v1158 = vpop.f32.mrb[0].mxu0
    %v1159 = vadd.f32 0.0, %v1158
    %v1160 = vpop.f32.mrb[0].mxu0
    %v1161 = vadd.f32 0.0, %v1160
    %1162 = vdwg.mxu0
    %v1163 = vadd.f32 %v1017, %v1088
    %v1164 = vadd.f32 %v1018, %v1090
    %v1165 = vadd.f32 %v1019, %v1159
    %v1166 = vadd.f32 %v1020, %v1161
    %v1167 = vxor.u32 %v1163, 2147483648
    %v1168 = vmul.f32 %v1167, 1.442695
    %v1169 = vpow.pop %v1168
    %v1170 = vadd.f32 %v1169, 1.0
    %v1171 = vrcp.pop %v1170
    %v1172 = vmul.f32 1.0, %v1171
    %v1173 = vxor.u32 %v1164, 2147483648
    %v1174 = vmul.f32 %v1173, 1.442695
    %v1175 = vpow.pop %v1174
    %v1176 = vadd.f32 %v1175, 1.0
    %v1177 = vrcp.pop %v1176
    %v1178 = vmul.f32 1.0, %v1177
    %v1179 = vtanh.pop %v1165
    %v1180 = vxor.u32 %v1166, 2147483648
    %v1181 = vmul.f32 %v1180, 1.442695
    %v1182 = vpow.pop %v1181
    %v1183 = vadd.f32 %v1182, 1.0
    %v1184 = vrcp.pop %v1183
    %v1185 = vmul.f32 1.0, %v1184
    %v1186 = vmul.f32 %v1178, %v1012
    %v1187 = vmul.f32 %v1172, %v1179
    %v1188 = vadd.f32 %v1186, %v1187
    %v1189 = vtanh.pop %v1188
    %v1190 = vmul.f32 %v1185, %v1189
    %1191 = vst.msk [vmem:[#allocation3 + $0x18] sm:$0xff] %vm141, %v1190
    %1192 = vst.msk [vmem:[#allocation3 + $0x20] sm:$0xff] %vm663, %v1190
    %v1193 = vld [vmem:[#allocation2 + $0x80] sm:$0xff]
    %v1194 = vld [vmem:[#allocation2 + $0x88] sm:$0xff]
    %v1195 = vld [vmem:[#allocation2 + $0x90] sm:$0xff]
    %v1196 = vld [vmem:[#allocation2 + $0x98] sm:$0xff]
    %1197 = vmatprep.subr.mxu0 %v425
    %1198 = vmatpush1.msra.mxu0 %v424
    %1199 = vmatprep.subr.mxu0 %v429
    %1200 = vmatpush1.msra.mxu0 %v428
    %1201 = vmatprep.subr.mxu0 %v433
    %1202 = vmatpush1.msra.mxu0 %v432
    %1203 = vmatprep.subr.mxu0 %v437
    %1204 = vmatpush1.msra.mxu0 %v436
    %1205 = vmatprep.subr.mxu0 %v441
    %1206 = vmatpush1.msra.mxu0 %v440
    %1207 = vmatprep.subr.mxu0 %v445
    %1208 = vmatpush1.msra.mxu0 %v444
    %1209 = vmatprep.subr.mxu0 %v449
    %1210 = vmatpush1.msra.mxu0 %v448
    %1211 = vmatprep.subr.mxu0 %v453
    %1212 = vmatpush1.msra.mxu0 %v452
    %1213 = vmatprep.subr.mxu0 %v457
    %1214 = vmatpush1.msra.mxu0 %v456
    %1215 = vmatprep.subr.mxu0 %v461
    %1216 = vmatpush1.msra.mxu0 %v460
    %1217 = vmatprep.subr.mxu0 %v465
    %1218 = vmatpush1.msra.mxu0 %v464
    %1219 = vmatprep.subr.mxu0 %v469
    %1220 = vmatpush1.msra.mxu0 %v468
    %1221 = vmatprep.subr.mxu0 %v473
    %1222 = vmatpush1.msra.mxu0 %v472
    %1223 = vmatprep.subr.mxu0 %v477
    %1224 = vmatpush1.msra.mxu0 %v476
    %1225 = vmatprep.subr.mxu0 %v481
    %1226 = vmatpush1.msra.mxu0 %v480
    %1227 = vmatprep.subr.mxu0 %v485
    %1228 = vmatpush1.msra.mxu0 %v484
    %1229 = vmatprep.subr.mxu0 0.0
    %1230 = vmatpush1.msra.mxu0 0.0
    %1231 = vmatprep.subr.mxu0 0.0
    %1232 = vmatpush1.msra.mxu0 0.0
    %1233 = vmatprep.subr.mxu0 0.0
    %1234 = vmatpush1.msra.mxu0 0.0
    %1235 = vmatprep.subr.mxu0 0.0
    %1236 = vmatpush1.msra.mxu0 0.0
    %1237 = vmatprep.subr.mxu0 0.0
    %1238 = vmatpush1.msra.mxu0 0.0
    %1239 = vmatprep.subr.mxu0 0.0
    %1240 = vmatpush1.msra.mxu0 0.0
    %1241 = vmatprep.subr.mxu0 0.0
    %1242 = vmatpush1.msra.mxu0 0.0
    %1243 = vmatprep.subr.mxu0 0.0
    %1244 = vmatpush1.msra.mxu0 0.0
    %1245 = vmatprep.subr.mxu0 0.0
    %1246 = vmatpush1.msra.mxu0 0.0
    %1247 = vmatprep.subr.mxu0 0.0
    %1248 = vmatpush1.msra.mxu0 0.0
    %1249 = vmatprep.subr.mxu0 0.0
    %1250 = vmatpush1.msra.mxu0 0.0
    %1251 = vmatprep.subr.mxu0 0.0
    %1252 = vmatpush1.msra.mxu0 0.0
    %1253 = vmatprep.subr.mxu0 0.0
    %1254 = vmatpush1.msra.mxu0 0.0
    %1255 = vmatprep.subr.mxu0 0.0
    %1256 = vmatpush1.msra.mxu0 0.0
    %1257 = vmatprep.subr.mxu0 0.0
    %1258 = vmatpush1.msra.mxu0 0.0
    %1259 = vmatprep.subr.mxu0 0.0
    %1260 = vmatpush1.msra.mxu0 0.0
    %1261 = vmatprep.mubr.f32.mxu0 0.0
    %1262 = vmatmul.mubr.f32.gmra.mrb[0].mxu0 %v1190
    %v1263 = vpop.f32.mrb[0].mxu0
    %v1264 = vadd.f32 0.0, %v1263
    %v1265 = vpop.f32.mrb[0].mxu0
    %v1266 = vadd.f32 0.0, %v1265
    %1267 = vdwg.mxu0
    %1268 = vmatprep.subr.mxu0 %v427
    %1269 = vmatpush1.msra.mxu0 %v426
    %1270 = vmatprep.subr.mxu0 %v431
    %1271 = vmatpush1.msra.mxu0 %v430
    %1272 = vmatprep.subr.mxu0 %v435
    %1273 = vmatpush1.msra.mxu0 %v434
    %1274 = vmatprep.subr.mxu0 %v439
    %1275 = vmatpush1.msra.mxu0 %v438
    %1276 = vmatprep.subr.mxu0 %v443
    %1277 = vmatpush1.msra.mxu0 %v442
    %1278 = vmatprep.subr.mxu0 %v447
    %1279 = vmatpush1.msra.mxu0 %v446
    %1280 = vmatprep.subr.mxu0 %v451
    %1281 = vmatpush1.msra.mxu0 %v450
    %1282 = vmatprep.subr.mxu0 %v455
    %1283 = vmatpush1.msra.mxu0 %v454
    %1284 = vmatprep.subr.mxu0 %v459
    %1285 = vmatpush1.msra.mxu0 %v458
    %1286 = vmatprep.subr.mxu0 %v463
    %1287 = vmatpush1.msra.mxu0 %v462
    %1288 = vmatprep.subr.mxu0 %v467
    %1289 = vmatpush1.msra.mxu0 %v466
    %1290 = vmatprep.subr.mxu0 %v471
    %1291 = vmatpush1.msra.mxu0 %v470
    %1292 = vmatprep.subr.mxu0 %v475
    %1293 = vmatpush1.msra.mxu0 %v474
    %1294 = vmatprep.subr.mxu0 %v479
    %1295 = vmatpush1.msra.mxu0 %v478
    %1296 = vmatprep.subr.mxu0 %v483
    %1297 = vmatpush1.msra.mxu0 %v482
    %1298 = vmatprep.subr.mxu0 %v487
    %1299 = vmatpush1.msra.mxu0 %v486
    %1300 = vmatprep.subr.mxu0 0.0
    %1301 = vmatpush1.msra.mxu0 0.0
    %1302 = vmatprep.subr.mxu0 0.0
    %1303 = vmatpush1.msra.mxu0 0.0
    %1304 = vmatprep.subr.mxu0 0.0
    %1305 = vmatpush1.msra.mxu0 0.0
    %1306 = vmatprep.subr.mxu0 0.0
    %1307 = vmatpush1.msra.mxu0 0.0
    %1308 = vmatprep.subr.mxu0 0.0
    %1309 = vmatpush1.msra.mxu0 0.0
    %1310 = vmatprep.subr.mxu0 0.0
    %1311 = vmatpush1.msra.mxu0 0.0
    %1312 = vmatprep.subr.mxu0 0.0
    %1313 = vmatpush1.msra.mxu0 0.0
    %1314 = vmatprep.subr.mxu0 0.0
    %1315 = vmatpush1.msra.mxu0 0.0
    %1316 = vmatprep.subr.mxu0 0.0
    %1317 = vmatpush1.msra.mxu0 0.0
    %1318 = vmatprep.subr.mxu0 0.0
    %1319 = vmatpush1.msra.mxu0 0.0
    %1320 = vmatprep.subr.mxu0 0.0
    %1321 = vmatpush1.msra.mxu0 0.0
    %1322 = vmatprep.subr.mxu0 0.0
    %1323 = vmatpush1.msra.mxu0 0.0
    %1324 = vmatprep.subr.mxu0 0.0
    %1325 = vmatpush1.msra.mxu0 0.0
    %1326 = vmatprep.subr.mxu0 0.0
    %1327 = vmatpush1.msra.mxu0 0.0
    %1328 = vmatprep.subr.mxu0 0.0
    %1329 = vmatpush1.msra.mxu0 0.0
    %1330 = vmatprep.subr.mxu0 0.0
    %1331 = vmatpush1.msra.mxu0 0.0
    %1332 = vmatprep.mubr.f32.mxu0 0.0
    %1333 = vmatmul.mubr.f32.gmra.mrb[0].mxu0 %v1190
    %v1334 = vpop.f32.mrb[0].mxu0
    %v1335 = vadd.f32 0.0, %v1334
    %v1336 = vpop.f32.mrb[0].mxu0
    %v1337 = vadd.f32 0.0, %v1336
    %1338 = vdwg.mxu0
    %v1339 = vadd.f32 %v1193, %v1264
    %v1340 = vadd.f32 %v1194, %v1266
    %v1341 = vadd.f32 %v1195, %v1335
    %v1342 = vadd.f32 %v1196, %v1337
    %v1343 = vxor.u32 %v1339, 2147483648
    %v1344 = vmul.f32 %v1343, 1.442695
    %v1345 = vpow.pop %v1344
    %v1346 = vadd.f32 %v1345, 1.0
    %v1347 = vrcp.pop %v1346
    %v1348 = vmul.f32 1.0, %v1347
    %v1349 = vxor.u32 %v1340, 2147483648
    %v1350 = vmul.f32 %v1349, 1.442695
    %v1351 = vpow.pop %v1350
    %v1352 = vadd.f32 %v1351, 1.0
    %v1353 = vrcp.pop %v1352
    %v1354 = vmul.f32 1.0, %v1353
    %v1355 = vtanh.pop %v1341
    %v1356 = vxor.u32 %v1342, 2147483648
    %v1357 = vmul.f32 %v1356, 1.442695
    %v1358 = vpow.pop %v1357
    %v1359 = vadd.f32 %v1358, 1.0
    %v1360 = vrcp.pop %v1359
    %v1361 = vmul.f32 1.0, %v1360
    %v1362 = vmul.f32 %v1354, %v1188
    %v1363 = vmul.f32 %v1348, %v1355
    %v1364 = vadd.f32 %v1362, %v1363
    %v1365 = vtanh.pop %v1364
    %v1366 = vmul.f32 %v1361, %v1365
    %1367 = vst.msk [vmem:[#allocation3 + $0x20] sm:$0xff] %vm141, %v1366
    %1368 = vst.msk [vmem:[#allocation3 + $0x18] sm:$0xff] %vm663, %v1366
    %v1369 = vld [vmem:[#allocation2 + $0xa0] sm:$0xff]
    %v1370 = vld [vmem:[#allocation2 + $0xa8] sm:$0xff]
    %v1371 = vld [vmem:[#allocation2 + $0xb0] sm:$0xff]
    %v1372 = vld [vmem:[#allocation2 + $0xb8] sm:$0xff]
    %1373 = vmatprep.subr.mxu0 %v425
    %1374 = vmatpush1.msra.mxu0 %v424
    %1375 = vmatprep.subr.mxu0 %v429
    %1376 = vmatpush1.msra.mxu0 %v428
    %1377 = vmatprep.subr.mxu0 %v433
    %1378 = vmatpush1.msra.mxu0 %v432
    %1379 = vmatprep.subr.mxu0 %v437
    %1380 = vmatpush1.msra.mxu0 %v436
    %1381 = vmatprep.subr.mxu0 %v441
    %1382 = vmatpush1.msra.mxu0 %v440
    %1383 = vmatprep.subr.mxu0 %v445
    %1384 = vmatpush1.msra.mxu0 %v444
    %1385 = vmatprep.subr.mxu0 %v449
    %1386 = vmatpush1.msra.mxu0 %v448
    %1387 = vmatprep.subr.mxu0 %v453
    %1388 = vmatpush1.msra.mxu0 %v452
    %1389 = vmatprep.subr.mxu0 %v457
    %1390 = vmatpush1.msra.mxu0 %v456
    %1391 = vmatprep.subr.mxu0 %v461
    %1392 = vmatpush1.msra.mxu0 %v460
    %1393 = vmatprep.subr.mxu0 %v465
    %1394 = vmatpush1.msra.mxu0 %v464
    %1395 = vmatprep.subr.mxu0 %v469
    %1396 = vmatpush1.msra.mxu0 %v468
    %1397 = vmatprep.subr.mxu0 %v473
    %1398 = vmatpush1.msra.mxu0 %v472
    %1399 = vmatprep.subr.mxu0 %v477
    %1400 = vmatpush1.msra.mxu0 %v476
    %1401 = vmatprep.subr.mxu0 %v481
    %1402 = vmatpush1.msra.mxu0 %v480
    %1403 = vmatprep.subr.mxu0 %v485
    %1404 = vmatpush1.msra.mxu0 %v484
    %1405 = vmatprep.subr.mxu0 0.0
    %1406 = vmatpush1.msra.mxu0 0.0
    %1407 = vmatprep.subr.mxu0 0.0
    %1408 = vmatpush1.msra.mxu0 0.0
    %1409 = vmatprep.subr.mxu0 0.0
    %1410 = vmatpush1.msra.mxu0 0.0
    %1411 = vmatprep.subr.mxu0 0.0
    %1412 = vmatpush1.msra.mxu0 0.0
    %1413 = vmatprep.subr.mxu0 0.0
    %1414 = vmatpush1.msra.mxu0 0.0
    %1415 = vmatprep.subr.mxu0 0.0
    %1416 = vmatpush1.msra.mxu0 0.0
    %1417 = vmatprep.subr.mxu0 0.0
    %1418 = vmatpush1.msra.mxu0 0.0
    %1419 = vmatprep.subr.mxu0 0.0
    %1420 = vmatpush1.msra.mxu0 0.0
    %1421 = vmatprep.subr.mxu0 0.0
    %1422 = vmatpush1.msra.mxu0 0.0
    %1423 = vmatprep.subr.mxu0 0.0
    %1424 = vmatpush1.msra.mxu0 0.0
    %1425 = vmatprep.subr.mxu0 0.0
    %1426 = vmatpush1.msra.mxu0 0.0
    %1427 = vmatprep.subr.mxu0 0.0
    %1428 = vmatpush1.msra.mxu0 0.0
    %1429 = vmatprep.subr.mxu0 0.0
    %1430 = vmatpush1.msra.mxu0 0.0
    %1431 = vmatprep.subr.mxu0 0.0
    %1432 = vmatpush1.msra.mxu0 0.0
    %1433 = vmatprep.subr.mxu0 0.0
    %1434 = vmatpush1.msra.mxu0 0.0
    %1435 = vmatprep.subr.mxu0 0.0
    %1436 = vmatpush1.msra.mxu0 0.0
    %1437 = vmatprep.mubr.f32.mxu0 0.0
    %1438 = vmatmul.mubr.f32.gmra.mrb[0].mxu0 %v1366
    %v1439 = vpop.f32.mrb[0].mxu0
    %v1440 = vadd.f32 0.0, %v1439
    %v1441 = vpop.f32.mrb[0].mxu0
    %v1442 = vadd.f32 0.0, %v1441
    %1443 = vdwg.mxu0
    %1444 = vmatprep.subr.mxu0 %v427
    %1445 = vmatpush1.msra.mxu0 %v426
    %1446 = vmatprep.subr.mxu0 %v431
    %1447 = vmatpush1.msra.mxu0 %v430
    %1448 = vmatprep.subr.mxu0 %v435
    %1449 = vmatpush1.msra.mxu0 %v434
    %1450 = vmatprep.subr.mxu0 %v439
    %1451 = vmatpush1.msra.mxu0 %v438
    %1452 = vmatprep.subr.mxu0 %v443
    %1453 = vmatpush1.msra.mxu0 %v442
    %1454 = vmatprep.subr.mxu0 %v447
    %1455 = vmatpush1.msra.mxu0 %v446
    %1456 = vmatprep.subr.mxu0 %v451
    %1457 = vmatpush1.msra.mxu0 %v450
    %1458 = vmatprep.subr.mxu0 %v455
    %1459 = vmatpush1.msra.mxu0 %v454
    %1460 = vmatprep.subr.mxu0 %v459
    %1461 = vmatpush1.msra.mxu0 %v458
    %1462 = vmatprep.subr.mxu0 %v463
    %1463 = vmatpush1.msra.mxu0 %v462
    %1464 = vmatprep.subr.mxu0 %v467
    %1465 = vmatpush1.msra.mxu0 %v466
    %1466 = vmatprep.subr.mxu0 %v471
    %1467 = vmatpush1.msra.mxu0 %v470
    %1468 = vmatprep.subr.mxu0 %v475
    %1469 = vmatpush1.msra.mxu0 %v474
    %1470 = vmatprep.subr.mxu0 %v479
    %1471 = vmatpush1.msra.mxu0 %v478
    %1472 = vmatprep.subr.mxu0 %v483
    %1473 = vmatpush1.msra.mxu0 %v482
    %1474 = vmatprep.subr.mxu0 %v487
    %1475 = vmatpush1.msra.mxu0 %v486
    %1476 = vmatprep.subr.mxu0 0.0
    %1477 = vmatpush1.msra.mxu0 0.0
    %1478 = vmatprep.subr.mxu0 0.0
    %1479 = vmatpush1.msra.mxu0 0.0
    %1480 = vmatprep.subr.mxu0 0.0
    %1481 = vmatpush1.msra.mxu0 0.0
    %1482 = vmatprep.subr.mxu0 0.0
    %1483 = vmatpush1.msra.mxu0 0.0
    %1484 = vmatprep.subr.mxu0 0.0
    %1485 = vmatpush1.msra.mxu0 0.0
    %1486 = vmatprep.subr.mxu0 0.0
    %1487 = vmatpush1.msra.mxu0 0.0
    %1488 = vmatprep.subr.mxu0 0.0
    %1489 = vmatpush1.msra.mxu0 0.0
    %1490 = vmatprep.subr.mxu0 0.0
    %1491 = vmatpush1.msra.mxu0 0.0
    %1492 = vmatprep.subr.mxu0 0.0
    %1493 = vmatpush1.msra.mxu0 0.0
    %1494 = vmatprep.subr.mxu0 0.0
    %1495 = vmatpush1.msra.mxu0 0.0
    %1496 = vmatprep.subr.mxu0 0.0
    %1497 = vmatpush1.msra.mxu0 0.0
    %1498 = vmatprep.subr.mxu0 0.0
    %1499 = vmatpush1.msra.mxu0 0.0
    %1500 = vmatprep.subr.mxu0 0.0
    %1501 = vmatpush1.msra.mxu0 0.0
    %1502 = vmatprep.subr.mxu0 0.0
    %1503 = vmatpush1.msra.mxu0 0.0
    %1504 = vmatprep.subr.mxu0 0.0
    %1505 = vmatpush1.msra.mxu0 0.0
    %1506 = vmatprep.subr.mxu0 0.0
    %1507 = vmatpush1.msra.mxu0 0.0
    %1508 = vmatprep.mubr.f32.mxu0 0.0
    %1509 = vmatmul.mubr.f32.gmra.mrb[0].mxu0 %v1366
    %v1510 = vpop.f32.mrb[0].mxu0
    %v1511 = vadd.f32 0.0, %v1510
    %v1512 = vpop.f32.mrb[0].mxu0
    %v1513 = vadd.f32 0.0, %v1512
    %1514 = vdwg.mxu0
    %v1515 = vadd.f32 %v1369, %v1440
    %v1516 = vadd.f32 %v1370, %v1442
    %v1517 = vadd.f32 %v1371, %v1511
    %v1518 = vadd.f32 %v1372, %v1513
    %v1519 = vxor.u32 %v1515, 2147483648
    %v1520 = vmul.f32 %v1519, 1.442695
    %v1521 = vpow.pop %v1520
    %v1522 = vadd.f32 %v1521, 1.0
    %v1523 = vrcp.pop %v1522
    %v1524 = vmul.f32 1.0, %v1523
    %v1525 = vxor.u32 %v1516, 2147483648
    %v1526 = vmul.f32 %v1525, 1.442695
    %v1527 = vpow.pop %v1526
    %v1528 = vadd.f32 %v1527, 1.0
    %v1529 = vrcp.pop %v1528
    %v1530 = vmul.f32 1.0, %v1529
    %v1531 = vtanh.pop %v1517
    %v1532 = vxor.u32 %v1518, 2147483648
    %v1533 = vmul.f32 %v1532, 1.442695
    %v1534 = vpow.pop %v1533
    %v1535 = vadd.f32 %v1534, 1.0
    %v1536 = vrcp.pop %v1535
    %v1537 = vmul.f32 1.0, %v1536
    %v1538 = vmul.f32 %v1530, %v1364
    %v1539 = vmul.f32 %v1524, %v1531
    %v1540 = vadd.f32 %v1538, %v1539
    %v1541 = vtanh.pop %v1540
    %v1542 = vmul.f32 %v1537, %v1541
    %1543 = vst.msk [vmem:[#allocation3 + $0x28] sm:$0xff] %vm141, %v1542
    %1544 = vst.msk [vmem:[#allocation3 + $0x10] sm:$0xff] %vm663, %v1542
    %v1545 = vld [vmem:[#allocation2 + $0xc0] sm:$0xff]
    %v1546 = vld [vmem:[#allocation2 + $0xc8] sm:$0xff]
    %v1547 = vld [vmem:[#allocation2 + $0xd0] sm:$0xff]
    %v1548 = vld [vmem:[#allocation2 + $0xd8] sm:$0xff]
    %1549 = vmatprep.subr.mxu0 %v425
    %1550 = vmatpush1.msra.mxu0 %v424
    %1551 = vmatprep.subr.mxu0 %v429
    %1552 = vmatpush1.msra.mxu0 %v428
    %1553 = vmatprep.subr.mxu0 %v433
    %1554 = vmatpush1.msra.mxu0 %v432
    %1555 = vmatprep.subr.mxu0 %v437
    %1556 = vmatpush1.msra.mxu0 %v436
    %1557 = vmatprep.subr.mxu0 %v441
    %1558 = vmatpush1.msra.mxu0 %v440
    %1559 = vmatprep.subr.mxu0 %v445
    %1560 = vmatpush1.msra.mxu0 %v444
    %1561 = vmatprep.subr.mxu0 %v449
    %1562 = vmatpush1.msra.mxu0 %v448
    %1563 = vmatprep.subr.mxu0 %v453
    %1564 = vmatpush1.msra.mxu0 %v452
    %1565 = vmatprep.subr.mxu0 %v457
    %1566 = vmatpush1.msra.mxu0 %v456
    %1567 = vmatprep.subr.mxu0 %v461
    %1568 = vmatpush1.msra.mxu0 %v460
    %1569 = vmatprep.subr.mxu0 %v465
    %1570 = vmatpush1.msra.mxu0 %v464
    %1571 = vmatprep.subr.mxu0 %v469
    %1572 = vmatpush1.msra.mxu0 %v468
    %1573 = vmatprep.subr.mxu0 %v473
    %1574 = vmatpush1.msra.mxu0 %v472
    %1575 = vmatprep.subr.mxu0 %v477
    %1576 = vmatpush1.msra.mxu0 %v476
    %1577 = vmatprep.subr.mxu0 %v481
    %1578 = vmatpush1.msra.mxu0 %v480
    %1579 = vmatprep.subr.mxu0 %v485
    %1580 = vmatpush1.msra.mxu0 %v484
    %1581 = vmatprep.subr.mxu0 0.0
    %1582 = vmatpush1.msra.mxu0 0.0
    %1583 = vmatprep.subr.mxu0 0.0
    %1584 = vmatpush1.msra.mxu0 0.0
    %1585 = vmatprep.subr.mxu0 0.0
    %1586 = vmatpush1.msra.mxu0 0.0
    %1587 = vmatprep.subr.mxu0 0.0
    %1588 = vmatpush1.msra.mxu0 0.0
    %1589 = vmatprep.subr.mxu0 0.0
    %1590 = vmatpush1.msra.mxu0 0.0
    %1591 = vmatprep.subr.mxu0 0.0
    %1592 = vmatpush1.msra.mxu0 0.0
    %1593 = vmatprep.subr.mxu0 0.0
    %1594 = vmatpush1.msra.mxu0 0.0
    %1595 = vmatprep.subr.mxu0 0.0
    %1596 = vmatpush1.msra.mxu0 0.0
    %1597 = vmatprep.subr.mxu0 0.0
    %1598 = vmatpush1.msra.mxu0 0.0
    %1599 = vmatprep.subr.mxu0 0.0
    %1600 = vmatpush1.msra.mxu0 0.0
    %1601 = vmatprep.subr.mxu0 0.0
    %1602 = vmatpush1.msra.mxu0 0.0
    %1603 = vmatprep.subr.mxu0 0.0
    %1604 = vmatpush1.msra.mxu0 0.0
    %1605 = vmatprep.subr.mxu0 0.0
    %1606 = vmatpush1.msra.mxu0 0.0
    %1607 = vmatprep.subr.mxu0 0.0
    %1608 = vmatpush1.msra.mxu0 0.0
    %1609 = vmatprep.subr.mxu0 0.0
    %1610 = vmatpush1.msra.mxu0 0.0
    %1611 = vmatprep.subr.mxu0 0.0
    %1612 = vmatpush1.msra.mxu0 0.0
    %1613 = vmatprep.mubr.f32.mxu0 0.0
    %1614 = vmatmul.mubr.f32.gmra.mrb[0].mxu0 %v1542
    %v1615 = vpop.f32.mrb[0].mxu0
    %v1616 = vadd.f32 0.0, %v1615
    %v1617 = vpop.f32.mrb[0].mxu0
    %v1618 = vadd.f32 0.0, %v1617
    %1619 = vdwg.mxu0
    %1620 = vmatprep.subr.mxu0 %v427
    %1621 = vmatpush1.msra.mxu0 %v426
    %1622 = vmatprep.subr.mxu0 %v431
    %1623 = vmatpush1.msra.mxu0 %v430
    %1624 = vmatprep.subr.mxu0 %v435
    %1625 = vmatpush1.msra.mxu0 %v434
    %1626 = vmatprep.subr.mxu0 %v439
    %1627 = vmatpush1.msra.mxu0 %v438
    %1628 = vmatprep.subr.mxu0 %v443
    %1629 = vmatpush1.msra.mxu0 %v442
    %1630 = vmatprep.subr.mxu0 %v447
    %1631 = vmatpush1.msra.mxu0 %v446
    %1632 = vmatprep.subr.mxu0 %v451
    %1633 = vmatpush1.msra.mxu0 %v450
    %1634 = vmatprep.subr.mxu0 %v455
    %1635 = vmatpush1.msra.mxu0 %v454
    %1636 = vmatprep.subr.mxu0 %v459
    %1637 = vmatpush1.msra.mxu0 %v458
    %1638 = vmatprep.subr.mxu0 %v463
    %1639 = vmatpush1.msra.mxu0 %v462
    %1640 = vmatprep.subr.mxu0 %v467
    %1641 = vmatpush1.msra.mxu0 %v466
    %1642 = vmatprep.subr.mxu0 %v471
    %1643 = vmatpush1.msra.mxu0 %v470
    %1644 = vmatprep.subr.mxu0 %v475
    %1645 = vmatpush1.msra.mxu0 %v474
    %1646 = vmatprep.subr.mxu0 %v479
    %1647 = vmatpush1.msra.mxu0 %v478
    %1648 = vmatprep.subr.mxu0 %v483
    %1649 = vmatpush1.msra.mxu0 %v482
    %1650 = vmatprep.subr.mxu0 %v487
    %1651 = vmatpush1.msra.mxu0 %v486
    %1652 = vmatprep.subr.mxu0 0.0
    %1653 = vmatpush1.msra.mxu0 0.0
    %1654 = vmatprep.subr.mxu0 0.0
    %1655 = vmatpush1.msra.mxu0 0.0
    %1656 = vmatprep.subr.mxu0 0.0
    %1657 = vmatpush1.msra.mxu0 0.0
    %1658 = vmatprep.subr.mxu0 0.0
    %1659 = vmatpush1.msra.mxu0 0.0
    %1660 = vmatprep.subr.mxu0 0.0
    %1661 = vmatpush1.msra.mxu0 0.0
    %1662 = vmatprep.subr.mxu0 0.0
    %1663 = vmatpush1.msra.mxu0 0.0
    %1664 = vmatprep.subr.mxu0 0.0
    %1665 = vmatpush1.msra.mxu0 0.0
    %1666 = vmatprep.subr.mxu0 0.0
    %1667 = vmatpush1.msra.mxu0 0.0
    %1668 = vmatprep.subr.mxu0 0.0
    %1669 = vmatpush1.msra.mxu0 0.0
    %1670 = vmatprep.subr.mxu0 0.0
    %1671 = vmatpush1.msra.mxu0 0.0
    %1672 = vmatprep.subr.mxu0 0.0
    %1673 = vmatpush1.msra.mxu0 0.0
    %1674 = vmatprep.subr.mxu0 0.0
    %1675 = vmatpush1.msra.mxu0 0.0
    %1676 = vmatprep.subr.mxu0 0.0
    %1677 = vmatpush1.msra.mxu0 0.0
    %1678 = vmatprep.subr.mxu0 0.0
    %1679 = vmatpush1.msra.mxu0 0.0
    %1680 = vmatprep.subr.mxu0 0.0
    %1681 = vmatpush1.msra.mxu0 0.0
    %1682 = vmatprep.subr.mxu0 0.0
    %1683 = vmatpush1.msra.mxu0 0.0
    %1684 = vmatprep.mubr.f32.mxu0 0.0
    %1685 = vmatmul.mubr.f32.gmra.mrb[0].mxu0 %v1542
    %v1686 = vpop.f32.mrb[0].mxu0
    %v1687 = vadd.f32 0.0, %v1686
    %v1688 = vpop.f32.mrb[0].mxu0
    %v1689 = vadd.f32 0.0, %v1688
    %1690 = vdwg.mxu0
    %v1691 = vadd.f32 %v1545, %v1616
    %v1692 = vadd.f32 %v1546, %v1618
    %v1693 = vadd.f32 %v1547, %v1687
    %v1694 = vadd.f32 %v1548, %v1689
    %v1695 = vxor.u32 %v1691, 2147483648
    %v1696 = vmul.f32 %v1695, 1.442695
    %v1697 = vpow.pop %v1696
    %v1698 = vadd.f32 %v1697, 1.0
    %v1699 = vrcp.pop %v1698
    %v1700 = vmul.f32 1.0, %v1699
    %v1701 = vxor.u32 %v1692, 2147483648
    %v1702 = vmul.f32 %v1701, 1.442695
    %v1703 = vpow.pop %v1702
    %v1704 = vadd.f32 %v1703, 1.0
    %v1705 = vrcp.pop %v1704
    %v1706 = vmul.f32 1.0, %v1705
    %v1707 = vtanh.pop %v1693
    %v1708 = vxor.u32 %v1694, 2147483648
    %v1709 = vmul.f32 %v1708, 1.442695
    %v1710 = vpow.pop %v1709
    %v1711 = vadd.f32 %v1710, 1.0
    %v1712 = vrcp.pop %v1711
    %v1713 = vmul.f32 1.0, %v1712
    %v1714 = vmul.f32 %v1706, %v1540
    %v1715 = vmul.f32 %v1700, %v1707
    %v1716 = vadd.f32 %v1714, %v1715
    %v1717 = vtanh.pop %v1716
    %v1718 = vmul.f32 %v1713, %v1717
    %1719 = vst.msk [vmem:[#allocation3 + $0x30] sm:$0xff] %vm141, %v1718
    %1720 = vst.msk [vmem:[#allocation3 + $0x8] sm:$0xff] %vm663, %v1718
    %v1721 = vld [vmem:[#allocation2 + $0xe0] sm:$0xff]
    %v1722 = vld [vmem:[#allocation2 + $0xe8] sm:$0xff]
    %v1723 = vld [vmem:[#allocation2 + $0xf0] sm:$0xff]
    %v1724 = vld [vmem:[#allocation2 + $0xf8] sm:$0xff]
    %1725 = vmatprep.subr.mxu0 %v425
    %1726 = vmatpush1.msra.mxu0 %v424
    %1727 = vmatprep.subr.mxu0 %v429
    %1728 = vmatpush1.msra.mxu0 %v428
    %1729 = vmatprep.subr.mxu0 %v433
    %1730 = vmatpush1.msra.mxu0 %v432
    %1731 = vmatprep.subr.mxu0 %v437
    %1732 = vmatpush1.msra.mxu0 %v436
    %1733 = vmatprep.subr.mxu0 %v441
    %1734 = vmatpush1.msra.mxu0 %v440
    %1735 = vmatprep.subr.mxu0 %v445
    %1736 = vmatpush1.msra.mxu0 %v444
    %1737 = vmatprep.subr.mxu0 %v449
    %1738 = vmatpush1.msra.mxu0 %v448
    %1739 = vmatprep.subr.mxu0 %v453
    %1740 = vmatpush1.msra.mxu0 %v452
    %1741 = vmatprep.subr.mxu0 %v457
    %1742 = vmatpush1.msra.mxu0 %v456
    %1743 = vmatprep.subr.mxu0 %v461
    %1744 = vmatpush1.msra.mxu0 %v460
    %1745 = vmatprep.subr.mxu0 %v465
    %1746 = vmatpush1.msra.mxu0 %v464
    %1747 = vmatprep.subr.mxu0 %v469
    %1748 = vmatpush1.msra.mxu0 %v468
    %1749 = vmatprep.subr.mxu0 %v473
    %1750 = vmatpush1.msra.mxu0 %v472
    %1751 = vmatprep.subr.mxu0 %v477
    %1752 = vmatpush1.msra.mxu0 %v476
    %1753 = vmatprep.subr.mxu0 %v481
    %1754 = vmatpush1.msra.mxu0 %v480
    %1755 = vmatprep.subr.mxu0 %v485
    %1756 = vmatpush1.msra.mxu0 %v484
    %1757 = vmatprep.subr.mxu0 0.0
    %1758 = vmatpush1.msra.mxu0 0.0
    %1759 = vmatprep.subr.mxu0 0.0
    %1760 = vmatpush1.msra.mxu0 0.0
    %1761 = vmatprep.subr.mxu0 0.0
    %1762 = vmatpush1.msra.mxu0 0.0
    %1763 = vmatprep.subr.mxu0 0.0
    %1764 = vmatpush1.msra.mxu0 0.0
    %1765 = vmatprep.subr.mxu0 0.0
    %1766 = vmatpush1.msra.mxu0 0.0
    %1767 = vmatprep.subr.mxu0 0.0
    %1768 = vmatpush1.msra.mxu0 0.0
    %1769 = vmatprep.subr.mxu0 0.0
    %1770 = vmatpush1.msra.mxu0 0.0
    %1771 = vmatprep.subr.mxu0 0.0
    %1772 = vmatpush1.msra.mxu0 0.0
    %1773 = vmatprep.subr.mxu0 0.0
    %1774 = vmatpush1.msra.mxu0 0.0
    %1775 = vmatprep.subr.mxu0 0.0
    %1776 = vmatpush1.msra.mxu0 0.0
    %1777 = vmatprep.subr.mxu0 0.0
    %1778 = vmatpush1.msra.mxu0 0.0
    %1779 = vmatprep.subr.mxu0 0.0
    %1780 = vmatpush1.msra.mxu0 0.0
    %1781 = vmatprep.subr.mxu0 0.0
    %1782 = vmatpush1.msra.mxu0 0.0
    %1783 = vmatprep.subr.mxu0 0.0
    %1784 = vmatpush1.msra.mxu0 0.0
    %1785 = vmatprep.subr.mxu0 0.0
    %1786 = vmatpush1.msra.mxu0 0.0
    %1787 = vmatprep.subr.mxu0 0.0
    %1788 = vmatpush1.msra.mxu0 0.0
    %1789 = vmatprep.mubr.f32.mxu0 0.0
    %1790 = vmatmul.mubr.f32.gmra.mrb[0].mxu0 %v1718
    %v1791 = vpop.f32.mrb[0].mxu0
    %v1792 = vadd.f32 0.0, %v1791
    %v1793 = vpop.f32.mrb[0].mxu0
    %v1794 = vadd.f32 0.0, %v1793
    %1795 = vdwg.mxu0
    %1796 = vmatprep.subr.mxu0 %v427
    %1797 = vmatpush1.msra.mxu0 %v426
    %1798 = vmatprep.subr.mxu0 %v431
    %1799 = vmatpush1.msra.mxu0 %v430
    %1800 = vmatprep.subr.mxu0 %v435
    %1801 = vmatpush1.msra.mxu0 %v434
    %1802 = vmatprep.subr.mxu0 %v439
    %1803 = vmatpush1.msra.mxu0 %v438
    %1804 = vmatprep.subr.mxu0 %v443
    %1805 = vmatpush1.msra.mxu0 %v442
    %1806 = vmatprep.subr.mxu0 %v447
    %1807 = vmatpush1.msra.mxu0 %v446
    %1808 = vmatprep.subr.mxu0 %v451
    %1809 = vmatpush1.msra.mxu0 %v450
    %1810 = vmatprep.subr.mxu0 %v455
    %1811 = vmatpush1.msra.mxu0 %v454
    %1812 = vmatprep.subr.mxu0 %v459
    %1813 = vmatpush1.msra.mxu0 %v458
    %1814 = vmatprep.subr.mxu0 %v463
    %1815 = vmatpush1.msra.mxu0 %v462
    %1816 = vmatprep.subr.mxu0 %v467
    %1817 = vmatpush1.msra.mxu0 %v466
    %1818 = vmatprep.subr.mxu0 %v471
    %1819 = vmatpush1.msra.mxu0 %v470
    %1820 = vmatprep.subr.mxu0 %v475
    %1821 = vmatpush1.msra.mxu0 %v474
    %1822 = vmatprep.subr.mxu0 %v479
    %1823 = vmatpush1.msra.mxu0 %v478
    %1824 = vmatprep.subr.mxu0 %v483
    %1825 = vmatpush1.msra.mxu0 %v482
    %1826 = vmatprep.subr.mxu0 %v487
    %1827 = vmatpush1.msra.mxu0 %v486
    %1828 = vmatprep.subr.mxu0 0.0
    %1829 = vmatpush1.msra.mxu0 0.0
    %1830 = vmatprep.subr.mxu0 0.0
    %1831 = vmatpush1.msra.mxu0 0.0
    %1832 = vmatprep.subr.mxu0 0.0
    %1833 = vmatpush1.msra.mxu0 0.0
    %1834 = vmatprep.subr.mxu0 0.0
    %1835 = vmatpush1.msra.mxu0 0.0
    %1836 = vmatprep.subr.mxu0 0.0
    %1837 = vmatpush1.msra.mxu0 0.0
    %1838 = vmatprep.subr.mxu0 0.0
    %1839 = vmatpush1.msra.mxu0 0.0
    %1840 = vmatprep.subr.mxu0 0.0
    %1841 = vmatpush1.msra.mxu0 0.0
    %1842 = vmatprep.subr.mxu0 0.0
    %1843 = vmatpush1.msra.mxu0 0.0
    %1844 = vmatprep.subr.mxu0 0.0
    %1845 = vmatpush1.msra.mxu0 0.0
    %1846 = vmatprep.subr.mxu0 0.0
    %1847 = vmatpush1.msra.mxu0 0.0
    %1848 = vmatprep.subr.mxu0 0.0
    %1849 = vmatpush1.msra.mxu0 0.0
    %1850 = vmatprep.subr.mxu0 0.0
    %1851 = vmatpush1.msra.mxu0 0.0
    %1852 = vmatprep.subr.mxu0 0.0
    %1853 = vmatpush1.msra.mxu0 0.0
    %1854 = vmatprep.subr.mxu0 0.0
    %1855 = vmatpush1.msra.mxu0 0.0
    %1856 = vmatprep.subr.mxu0 0.0
    %1857 = vmatpush1.msra.mxu0 0.0
    %1858 = vmatprep.subr.mxu0 0.0
    %1859 = vmatpush1.msra.mxu0 0.0
    %1860 = vmatprep.mubr.f32.mxu0 0.0
    %1861 = vmatmul.mubr.f32.gmra.mrb[0].mxu0 %v1718
    %v1862 = vpop.f32.mrb[0].mxu0
    %v1863 = vadd.f32 0.0, %v1862
    %v1864 = vpop.f32.mrb[0].mxu0
    %v1865 = vadd.f32 0.0, %v1864
    %1866 = vdwg.mxu0
    %v1867 = vadd.f32 %v1721, %v1792
    %v1868 = vadd.f32 %v1722, %v1794
    %v1869 = vadd.f32 %v1723, %v1863
    %v1870 = vadd.f32 %v1724, %v1865
    %v1871 = vxor.u32 %v1867, 2147483648
    %v1872 = vmul.f32 %v1871, 1.442695
    %v1873 = vpow.pop %v1872
    %v1874 = vadd.f32 %v1873, 1.0
    %v1875 = vrcp.pop %v1874
    %v1876 = vmul.f32 1.0, %v1875
    %v1877 = vxor.u32 %v1868, 2147483648
    %v1878 = vmul.f32 %v1877, 1.442695
    %v1879 = vpow.pop %v1878
    %v1880 = vadd.f32 %v1879, 1.0
    %v1881 = vrcp.pop %v1880
    %v1882 = vmul.f32 1.0, %v1881
    %v1883 = vtanh.pop %v1869
    %v1884 = vxor.u32 %v1870, 2147483648
    %v1885 = vmul.f32 %v1884, 1.442695
    %v1886 = vpow.pop %v1885
    %v1887 = vadd.f32 %v1886, 1.0
    %v1888 = vrcp.pop %v1887
    %v1889 = vmul.f32 1.0, %v1888
    %v1890 = vmul.f32 %v1882, %v1716
    %v1891 = vmul.f32 %v1876, %v1883
    %v1892 = vadd.f32 %v1890, %v1891
    %v1893 = vtanh.pop %v1892
    %v1894 = vmul.f32 %v1889, %v1893
    %1895 = vst.msk [vmem:[#allocation3 + $0x38] sm:$0xff] %vm141, %v1894
    %1896 = vst.msk [vmem:[#allocation3] sm:$0xff] %vm663, %v1894
    %v1897 = vld [vmem:[#allocation3] sm:$0xff]
    %v1898 = vld [vmem:[#allocation3 + $0x8] sm:$0xff]
    %v1899 = vld [vmem:[#allocation3 + $0x10] sm:$0xff]
    %v1900 = vld [vmem:[#allocation3 + $0x18] sm:$0xff]
    %v1901 = vld [vmem:[#allocation3 + $0x20] sm:$0xff]
    %v1902 = vld [vmem:[#allocation3 + $0x28] sm:$0xff]
    %v1903 = vld [vmem:[#allocation3 + $0x30] sm:$0xff]
    %v1904 = vld [vmem:[#allocation3 + $0x38] sm:$0xff]
    %v1905 = vld [vmem:[#allocation10] sm:$0xff]
    %v1906 = vld [vmem:[#allocation10 + $0x8] sm:$0xff]
    %v1907 = vld [vmem:[#allocation10 + $0x10] sm:$0xff]
    %v1908 = vld [vmem:[#allocation10 + $0x18] sm:$0xff]
    %v1909 = vld [vmem:[#allocation10 + $0x20] sm:$0xff]
    %v1910 = vld [vmem:[#allocation10 + $0x28] sm:$0xff]
    %v1911 = vld [vmem:[#allocation10 + $0x30] sm:$0xff]
    %v1912 = vld [vmem:[#allocation10 + $0x38] sm:$0xff]
    %v1913 = vld [vmem:[#allocation10 + $0x40] sm:$0xff]
    %v1914 = vld [vmem:[#allocation10 + $0x48] sm:$0xff]
    %v1915 = vld [vmem:[#allocation10 + $0x50] sm:$0xff]
    %v1916 = vld [vmem:[#allocation10 + $0x58] sm:$0xff]
    %v1917 = vld [vmem:[#allocation10 + $0x60] sm:$0xff]
    %v1918 = vld [vmem:[#allocation10 + $0x68] sm:$0xff]
    %v1919 = vld [vmem:[#allocation10 + $0x70] sm:$0xff]
    %v1920 = vld [vmem:[#allocation10 + $0x78] sm:$0xff]
    %v1921 = vld [vmem:[%s5] sm:$0x1]
    %v1923 = vlaneseq
    %v1924 = vshrl.u32 %v1923, 7
    %v1925 = vsub.s32 0, %v1924
    %v1926 = vrot.slane %v1921, %v1925
    %1928 = vmatprep.subr.mxu0 0.0
    %1929 = vmatpush1.msra.mxu0 %v1905
    %1930 = vmatprep.subr.mxu0 0.0
    %1931 = vmatpush1.msra.mxu0 %v1906
    %1932 = vmatprep.subr.mxu0 0.0
    %1933 = vmatpush1.msra.mxu0 %v1907
    %1934 = vmatprep.subr.mxu0 0.0
    %1935 = vmatpush1.msra.mxu0 %v1908
    %1936 = vmatprep.subr.mxu0 0.0
    %1937 = vmatpush1.msra.mxu0 %v1909
    %1938 = vmatprep.subr.mxu0 0.0
    %1939 = vmatpush1.msra.mxu0 %v1910
    %1940 = vmatprep.subr.mxu0 0.0
    %1941 = vmatpush1.msra.mxu0 %v1911
    %1942 = vmatprep.subr.mxu0 0.0
    %1943 = vmatpush1.msra.mxu0 %v1912
    %1944 = vmatprep.subr.mxu0 0.0
    %1945 = vmatpush1.msra.mxu0 %v1913
    %1946 = vmatprep.subr.mxu0 0.0
    %1947 = vmatpush1.msra.mxu0 %v1914
    %1948 = vmatprep.subr.mxu0 0.0
    %1949 = vmatpush1.msra.mxu0 %v1915
    %1950 = vmatprep.subr.mxu0 0.0
    %1951 = vmatpush1.msra.mxu0 %v1916
    %1952 = vmatprep.subr.mxu0 0.0
    %1953 = vmatpush1.msra.mxu0 %v1917
    %1954 = vmatprep.subr.mxu0 0.0
    %1955 = vmatpush1.msra.mxu0 %v1918
    %1956 = vmatprep.subr.mxu0 0.0
    %1957 = vmatpush1.msra.mxu0 %v1919
    %1958 = vmatprep.subr.mxu0 0.0
    %1959 = vmatpush1.msra.mxu0 %v1920
    %1960 = vmatprep.subr.mxu0 0.0
    %1961 = vmatpush1.msra.mxu0 0.0
    %1962 = vmatprep.subr.mxu0 0.0
    %1963 = vmatpush1.msra.mxu0 0.0
    %1964 = vmatprep.subr.mxu0 0.0
    %1965 = vmatpush1.msra.mxu0 0.0
    %1966 = vmatprep.subr.mxu0 0.0
    %1967 = vmatpush1.msra.mxu0 0.0
    %1968 = vmatprep.subr.mxu0 0.0
    %1969 = vmatpush1.msra.mxu0 0.0
    %1970 = vmatprep.subr.mxu0 0.0
    %1971 = vmatpush1.msra.mxu0 0.0
    %1972 = vmatprep.subr.mxu0 0.0
    %1973 = vmatpush1.msra.mxu0 0.0
    %1974 = vmatprep.subr.mxu0 0.0
    %1975 = vmatpush1.msra.mxu0 0.0
    %1976 = vmatprep.subr.mxu0 0.0
    %1977 = vmatpush1.msra.mxu0 0.0
    %1978 = vmatprep.subr.mxu0 0.0
    %1979 = vmatpush1.msra.mxu0 0.0
    %1980 = vmatprep.subr.mxu0 0.0
    %1981 = vmatpush1.msra.mxu0 0.0
    %1982 = vmatprep.subr.mxu0 0.0
    %1983 = vmatpush1.msra.mxu0 0.0
    %1984 = vmatprep.subr.mxu0 0.0
    %1985 = vmatpush1.msra.mxu0 0.0
    %1986 = vmatprep.subr.mxu0 0.0
    %1987 = vmatpush1.msra.mxu0 0.0
    %1988 = vmatprep.subr.mxu0 0.0
    %1989 = vmatpush1.msra.mxu0 0.0
    %1990 = vmatprep.subr.mxu0 0.0
    %1991 = vmatpush1.msra.mxu0 0.0
    %1992 = vmatprep.mubr.f32.mxu0 0.0
    %1993 = vmatmul.mubr.f32.gmra.mrb[0].mxu0 %v1897
    %v1994 = vpop.f32.mrb[0].mxu0
    %v1995 = vadd.f32 %v1926, %v1994
    %v1996 = vpop.f32.mrb[0].mxu0
    %1997 = vmatprep.mubr.f32.mxu0 0.0
    %1998 = vmatmul.mubr.f32.gmra.mrb[0].mxu0 %v1898
    %v1999 = vpop.f32.mrb[0].mxu0
    %v2000 = vadd.f32 %v1926, %v1999
    %v2001 = vpop.f32.mrb[0].mxu0
    %2002 = vmatprep.mubr.f32.mxu0 0.0
    %2003 = vmatmul.mubr.f32.gmra.mrb[0].mxu0 %v1899
    %v2004 = vpop.f32.mrb[0].mxu0
    %v2005 = vadd.f32 %v1926, %v2004
    %v2006 = vpop.f32.mrb[0].mxu0
    %2007 = vmatprep.mubr.f32.mxu0 0.0
    %2008 = vmatmul.mubr.f32.gmra.mrb[0].mxu0 %v1900
    %v2009 = vpop.f32.mrb[0].mxu0
    %v2010 = vadd.f32 %v1926, %v2009
    %v2011 = vpop.f32.mrb[0].mxu0
    %2012 = vmatprep.mubr.f32.mxu0 0.0
    %2013 = vmatmul.mubr.f32.gmra.mrb[0].mxu0 %v1901
    %v2014 = vpop.f32.mrb[0].mxu0
    %v2015 = vadd.f32 %v1926, %v2014
    %v2016 = vpop.f32.mrb[0].mxu0
    %2017 = vmatprep.mubr.f32.mxu0 0.0
    %2018 = vmatmul.mubr.f32.gmra.mrb[0].mxu0 %v1902
    %v2019 = vpop.f32.mrb[0].mxu0
    %v2020 = vadd.f32 %v1926, %v2019
    %v2021 = vpop.f32.mrb[0].mxu0
    %2022 = vmatprep.mubr.f32.mxu0 0.0
    %2023 = vmatmul.mubr.f32.gmra.mrb[0].mxu0 %v1903
    %v2024 = vpop.f32.mrb[0].mxu0
    %v2025 = vadd.f32 %v1926, %v2024
    %v2026 = vpop.f32.mrb[0].mxu0
    %2027 = vmatprep.mubr.f32.mxu0 0.0
    %2028 = vmatmul.mubr.f32.gmra.mrb[0].mxu0 %v1904
    %v2029 = vpop.f32.mrb[0].mxu0
    %v2030 = vadd.f32 %v1926, %v2029
    %v2031 = vpop.f32.mrb[0].mxu0
    %2032 = vdwg.mxu0
    %2033 = vst [vmem:[#allocation12] sm:$0xff] %v1995
    %2034 = vst [vmem:[#allocation12 + $0x8] sm:$0xff] %v2000
    %2035 = vst [vmem:[#allocation12 + $0x10] sm:$0xff] %v2005
    %2036 = vst [vmem:[#allocation12 + $0x18] sm:$0xff] %v2010
    %2037 = vst [vmem:[#allocation12 + $0x20] sm:$0xff] %v2015
    %2038 = vst [vmem:[#allocation12 + $0x28] sm:$0xff] %v2020
    %2039 = vst [vmem:[#allocation12 + $0x30] sm:$0xff] %v2025
    %2040 = vst [vmem:[#allocation12 + $0x38] sm:$0xff] %v2030
    // Predicated region
    $region42: #{tpu_custom_call.1} parent=1 // pred_check
      _
    $region43: #{tpu_custom_call.1} parent=1 // pred_check_branch
      %2042 = sbr.rel (0) target = $region45
    $region44: #{tpu_custom_call.1} parent=1 // pred_region
      %s2044 = ssub.s32 1024, 1024
      %2045 = vsyncadd [#allocation6], %s2044
      %s2046 = sshll.u32 [#allocation12], 4
      %s2047 = int_to_ptr.vmem [resolvable:$true] %s2046
      %2052 = dma.vmem_to_hbm [thread:$0]  %s2047, 1024, %s6, [#allocation6], 128, 128, 8
    $region45: #{tpu_custom_call.1} parent=1 // pred_fallthru
      _
    // Predicated region
    $region46: #{tpu_custom_call.1} parent=1 // pred_check
      _
    $region47: #{tpu_custom_call.1} parent=1 // pred_check_branch
      %2054 = sbr.rel (0) target = $region49
    $region48: #{tpu_custom_call.1} parent=1 // pred_region
      %2055 = dma.done [#allocation6], 1024
    $region49: #{tpu_custom_call.1} parent=1 // pred_fallthru
      _
    %2056 = vsyncpa [#allocation5], 1
    %2057 = vsyncpa [#allocation8], 1
    %2058 = vsyncpa [#allocation11], 1
    %2059 = vsyncpa [#allocation6], 1

</llo_original>
